<compile_context>
chip_gen: v5e
topology: v5e:2x2
jax: 0.10.0
libtpu: 0.0.40
codegen_flags: <defaults>
</compile_context>

<pallas_src>
import jax
import jax.numpy as jnp
from jax.experimental import pallas as pl
from jax.experimental.pallas import tpu as pltpu

EPS = 1e-3


def _matmul_stats_kernel(x_ref, w_ref, y_ref, stats_ref):
    # x_ref:     [TM, Cin]        bf16
    # w_ref:     [Cin, Cout]      bf16
    # y_ref:     [TM, Cout]       f32  (conv output tile)
    # stats_ref: [1, 2, Cout]     f32  (per-tile partial [sum; sum_of_squares])
    y = jnp.dot(x_ref[...], w_ref[...], preferred_element_type=jnp.float32)
    y_ref[...] = y
    stats_ref[0, 0:1, :] = jnp.sum(y, axis=0, keepdims=True)
    stats_ref[0, 1:2, :] = jnp.sum(y * y, axis=0, keepdims=True)


def _scale_bias_kernel(y_ref, sb_ref, o_ref):
    # y_ref:  [TM, Cout] f32
    # sb_ref: [2, Cout]  f32  (row 0 = scale, row 1 = bias)
    sb = sb_ref[...]
    o_ref[...] = (y_ref[...] * sb[0:1, :] + sb[1:2, :]).astype(o_ref.dtype)


@jax.jit
def conv1x1_batchnorm(x_nchw, weight, gamma, beta):
    """x_nchw: [N, Cin, H, W]; weight: [Cout, Cin] (1x1 kernel squeezed);
    gamma, beta: [Cout]. Returns [N, Cout, H, W] (PyTorch layout)."""
    n, cin, h, w = x_nchw.shape
    cout = weight.shape[0]
    m = n * h * w

    # NCHW -> NHWC -> [M, Cin]; bf16 matmul operands, f32 accumulation.
    x_flat = jnp.transpose(x_nchw, (0, 2, 3, 1)).reshape(m, cin).astype(jnp.bfloat16)
    w_mat = weight.T.astype(jnp.bfloat16)  # [Cin, Cout]

    # Row tile: multiple of 256 (fills the 256-wide MXU on v6e/v7x, 2x128 on
    # v5e). Pad M with zero rows (exact for the stats, see header comment).
    tm = 512 if m > 256 else 256
    m_pad = ((m + tm - 1) // tm) * tm
    if m_pad != m:
        x_flat = jnp.pad(x_flat, ((0, m_pad - m), (0, 0)))
    num_tiles = m_pad // tm

    # ---- Phase 1: tiled matmul + per-tile partial stats ----
    y_pad, part_stats = pl.pallas_call(
        _matmul_stats_kernel,
        out_shape=(
            jax.ShapeDtypeStruct((m_pad, cout), jnp.float32),
            jax.ShapeDtypeStruct((num_tiles, 2, cout), jnp.float32),
        ),
        grid=(num_tiles,),
        in_specs=[
            pl.BlockSpec((tm, cin), lambda i: (i, 0)),
            pl.BlockSpec((cin, cout), lambda i: (0, 0)),
        ],
        out_specs=(
            pl.BlockSpec((tm, cout), lambda i: (i, 0)),
            pl.BlockSpec((1, 2, cout), lambda i: (i, 0, 0)),
        ),
        compiler_params=pltpu.CompilerParams(
            dimension_semantics=("parallel",),
        ),
    )(x_flat, w_mat)

    # ---- Fold BN (batch stats) into per-channel scale/bias (tiny op) ----
    stats = jnp.sum(part_stats, axis=0)            # [2, Cout]
    mean = stats[0] / m
    var = stats[1] / m - mean * mean               # biased variance
    inv_std = jax.lax.rsqrt(var + EPS)
    scale = gamma * inv_std
    bias = beta - mean * scale
    sb = jnp.stack([scale, bias], axis=0).astype(jnp.float32)  # [2, Cout]

    # ---- Phase 2: o = y * scale + bias, tiled over rows ----
    out_pad = pl.pallas_call(
        _scale_bias_kernel,
        out_shape=jax.ShapeDtypeStruct((m_pad, cout), jnp.float32),
        grid=(num_tiles,),
        in_specs=[
            pl.BlockSpec((tm, cout), lambda i: (i, 0)),
            pl.BlockSpec((2, cout), lambda i: (0, 0)),
        ],
        out_specs=pl.BlockSpec((tm, cout), lambda i: (i, 0)),
        compiler_params=pltpu.CompilerParams(
            dimension_semantics=("parallel",),
        ),
    )(y_pad, sb)

    # [M, Cout] -> NHWC -> NCHW
    out_flat = out_pad[:m]
    return jnp.transpose(out_flat.reshape(n, h, w, cout), (0, 3, 1, 2))
    # TODO(synk): PyTorch training-mode BN also updates running_mean/running_var
    # (unbiased variance) as a side effect; that buffer update does not affect
    # the returned tensor and is not materialized here.


if __name__ == "__main__":
    CIN, COUT = 768, 192
    N, H, W = 1, 14, 14  # the module's own input shape

    key = jax.random.PRNGKey(0)
    kx, kw, kg, kb = jax.random.split(key, 4)

    x = jax.random.normal(kx, (N, CIN, H, W), dtype=jnp.float32)
    weight = jax.random.normal(kw, (COUT, CIN), dtype=jnp.float32) * (1.0 / (CIN ** 0.5))
    gamma = 1.0 + 0.1 * jax.random.normal(kg, (COUT,), dtype=jnp.float32)
    beta = 0.1 * jax.random.normal(kb, (COUT,), dtype=jnp.float32)

    out = conv1x1_batchnorm(x, weight, gamma, beta)
    out = jax.block_until_ready(out)
    assert out.shape == (N, COUT, H, W)

    x_flat = jnp.transpose(x, (0, 2, 3, 1)).reshape(-1, CIN)

    # Reference 1: same bf16 input quantization as the kernel's MXU matmul,
    # f32 accumulation + f32 BN -> tight tolerance.
    xq = x_flat.astype(jnp.bfloat16).astype(jnp.float32)
    wq = weight.T.astype(jnp.bfloat16).astype(jnp.float32)
    y_q = jnp.dot(xq, wq, precision=jax.lax.Precision.HIGHEST)
    mu_q = y_q.mean(axis=0, keepdims=True)
    var_q = ((y_q - mu_q) ** 2).mean(axis=0, keepdims=True)
    ref_q = (y_q - mu_q) / jnp.sqrt(var_q + EPS) * gamma + beta
    ref_q = jnp.transpose(ref_q.reshape(N, H, W, COUT), (0, 3, 1, 2))
    assert jnp.allclose(out, ref_q, atol=2e-3, rtol=2e-3), "mismatch vs bf16-matched reference"

    # Reference 2: full-f32 conv + training-mode BN (PyTorch semantics);
    # loose tolerance accounts for the deliberate bf16 cast of matmul inputs.
    y_f = jnp.dot(x_flat, weight.T, precision=jax.lax.Precision.HIGHEST)
    mu_f = y_f.mean(axis=0, keepdims=True)
    var_f = ((y_f - mu_f) ** 2).mean(axis=0, keepdims=True)
    ref_f = (y_f - mu_f) / jnp.sqrt(var_f + EPS) * gamma + beta
    ref_f = jnp.transpose(ref_f.reshape(N, H, W, COUT), (0, 3, 1, 2))
    assert jnp.allclose(out, ref_f, atol=3e-2, rtol=3e-2), "mismatch vs f32 reference"

    print("KERNEL_OK")
</pallas_src>

<mosaic_0001>
module attributes {stable_mosaic.version = 11 : i64} {
  func.func @_matmul_stats_kernel(%arg0: i32, %arg1: memref<256x768xbf16, #tpu.memory_space<vmem>>, %arg2: memref<768x192xbf16, #tpu.memory_space<vmem>>, %arg3: memref<256x192xf32, #tpu.memory_space<vmem>>, %arg4: memref<1x2x192xf32, #tpu.memory_space<vmem>>) attributes {dimension_semantics = [#tpu.dimension_semantics<parallel>], iteration_bounds = array<i64: 1>, scalar_prefetch = 0 : i64, scratch_operands = 0 : i64, tpu.core_type = #tpu.core_type<tc>, window_params = [{transform_indices = @transform_0, window_bounds = array<i64: 256, 768>}, {pipeline_mode = #tpu.pipeline_mode<synchronous>, transform_indices = @transform_1, window_bounds = array<i64: 768, 192>}, {transform_indices = @transform_2, window_bounds = array<i64: 256, 192>}, {transform_indices = @transform_3, window_bounds = array<i64: 1, 2, 192>}]} {
    %c0 = arith.constant 0 : index
    %c0_0 = arith.constant 0 : index
    %0 = vector.load %arg1[%c0, %c0_0] : memref<256x768xbf16, #tpu.memory_space<vmem>>, vector<256x768xbf16>
    %c0_1 = arith.constant 0 : index
    %c0_2 = arith.constant 0 : index
    %1 = vector.load %arg2[%c0_1, %c0_2] : memref<768x192xbf16, #tpu.memory_space<vmem>>, vector<768x192xbf16>
    %cst = arith.constant dense<0.000000e+00> : vector<256x192xf32>
    %2 = tpu.matmul %0, %1, %cst {dimension_numbers = #tpu.dot_dimension_numbers<[1], [0], [0], [1], [0, 0, 1, 1], [], []>} : vector<256x768xbf16>, vector<768x192xbf16>, vector<256x192xf32> -> vector<256x192xf32>
    %c0_3 = arith.constant 0 : index
    %c0_4 = arith.constant 0 : index
    %3 = vector.load %arg3[%c0_3, %c0_4] : memref<256x192xf32, #tpu.memory_space<vmem>>, vector<256x192xf32>
    tpu.vector_store %arg3[%c0_3, %c0_4], %2 {strides = array<i32>} : memref<256x192xf32, #tpu.memory_space<vmem>>, vector<256x192xf32>,
    %cst_5 = arith.constant dense<0.000000e+00> : vector<192xf32>
    %4 = vector.multi_reduction <add>, %2, %cst_5 [0] : vector<256x192xf32> to vector<192xf32>
    %5 = vector.shape_cast %4 : vector<192xf32> to vector<1x192xf32>
    %c0_6 = arith.constant 0 : index
    %c0_7 = arith.constant 0 : index
    %c0_8 = arith.constant 0 : index
    %6 = vector.load %arg4[%c0_6, %c0_7, %c0_8] : memref<1x2x192xf32, #tpu.memory_space<vmem>>, vector<1x1x192xf32>
    %7 = vector.shape_cast %6 : vector<1x1x192xf32> to vector<1x192xf32>
    %8 = vector.shape_cast %5 : vector<1x192xf32> to vector<1x1x192xf32>
    tpu.vector_store %arg4[%c0_6, %c0_7, %c0_8], %8 {strides = array<i32>} : memref<1x2x192xf32, #tpu.memory_space<vmem>>, vector<1x1x192xf32>,
    %9 = arith.mulf %2, %2 : vector<256x192xf32>
    %cst_9 = arith.constant dense<0.000000e+00> : vector<192xf32>
    %10 = vector.multi_reduction <add>, %9, %cst_9 [0] : vector<256x192xf32> to vector<192xf32>
    %11 = vector.shape_cast %10 : vector<192xf32> to vector<1x192xf32>
    %c0_10 = arith.constant 0 : index
    %c1 = arith.constant 1 : index
    %c0_11 = arith.constant 0 : index
    %12 = vector.load %arg4[%c0_10, %c1, %c0_11] : memref<1x2x192xf32, #tpu.memory_space<vmem>>, vector<1x1x192xf32>
    %13 = vector.shape_cast %12 : vector<1x1x192xf32> to vector<1x192xf32>
    %14 = vector.shape_cast %11 : vector<1x192xf32> to vector<1x1x192xf32>
    tpu.vector_store %arg4[%c0_10, %c1, %c0_11], %14 {strides = array<i32>} : memref<1x2x192xf32, #tpu.memory_space<vmem>>, vector<1x1x192xf32>,
    return
  }
  func.func @transform_0(%arg0: i32) -> (i32, i32) {
    %c0_i32 = arith.constant 0 : i32
    %c0_i32_0 = arith.constant 0 : i32
    return %arg0, %c0_i32 : i32, i32
  }
  func.func @transform_1(%arg0: i32) -> (i32, i32) {
    %c0_i32 = arith.constant 0 : i32
    %c0_i32_0 = arith.constant 0 : i32
    %c0_i32_1 = arith.constant 0 : i32
    return %c0_i32, %c0_i32_0 : i32, i32
  }
  func.func @transform_2(%arg0: i32) -> (i32, i32) {
    %c0_i32 = arith.constant 0 : i32
    %c0_i32_0 = arith.constant 0 : i32
    return %arg0, %c0_i32 : i32, i32
  }
  func.func @transform_3(%arg0: i32) -> (i32, i32, i32) {
    %c0_i32 = arith.constant 0 : i32
    %c0_i32_0 = arith.constant 0 : i32
    %c0_i32_1 = arith.constant 0 : i32
    return %arg0, %c0_i32, %c0_i32_0 : i32, i32, i32
  }
}

module attributes {stable_mosaic.version = 11 : i64} {
  func.func @_scale_bias_kernel(%arg0: i32, %arg1: memref<256x192xf32, #tpu.memory_space<vmem>>, %arg2: memref<2x192xf32, #tpu.memory_space<vmem>>, %arg3: memref<256x192xf32, #tpu.memory_space<vmem>>) attributes {dimension_semantics = [#tpu.dimension_semantics<parallel>], iteration_bounds = array<i64: 1>, scalar_prefetch = 0 : i64, scratch_operands = 0 : i64, tpu.core_type = #tpu.core_type<tc>, window_params = [{transform_indices = @transform_0, window_bounds = array<i64: 256, 192>}, {pipeline_mode = #tpu.pipeline_mode<synchronous>, transform_indices = @transform_1, window_bounds = array<i64: 2, 192>}, {transform_indices = @transform_2, window_bounds = array<i64: 256, 192>}]} {
    %c0 = arith.constant 0 : index
    %c0_0 = arith.constant 0 : index
    %0 = vector.load %arg2[%c0, %c0_0] : memref<2x192xf32, #tpu.memory_space<vmem>>, vector<2x192xf32>
    %c0_1 = arith.constant 0 : index
    %c0_2 = arith.constant 0 : index
    %1 = vector.load %arg1[%c0_1, %c0_2] : memref<256x192xf32, #tpu.memory_space<vmem>>, vector<256x192xf32>
    %2 = vector.extract_strided_slice %0 {offsets = [0, 0], sizes = [1, 192], strides = [1, 1]} : vector<2x192xf32> to vector<1x192xf32>
    %3 = vector.broadcast %2 : vector<1x192xf32> to vector<256x192xf32>
    %4 = arith.mulf %1, %3 : vector<256x192xf32>
    %5 = vector.extract_strided_slice %0 {offsets = [1, 0], sizes = [1, 192], strides = [1, 1]} : vector<2x192xf32> to vector<1x192xf32>
    %6 = vector.broadcast %5 : vector<1x192xf32> to vector<256x192xf32>
    %7 = arith.addf %4, %6 : vector<256x192xf32>
    %c0_3 = arith.constant 0 : index
    %c0_4 = arith.constant 0 : index
    %8 = vector.load %arg3[%c0_3, %c0_4] : memref<256x192xf32, #tpu.memory_space<vmem>>, vector<256x192xf32>
    tpu.vector_store %arg3[%c0_3, %c0_4], %7 {strides = array<i32>} : memref<256x192xf32, #tpu.memory_space<vmem>>, vector<256x192xf32>,
    return
  }
  func.func @transform_0(%arg0: i32) -> (i32, i32) {
    %c0_i32 = arith.constant 0 : i32
    %c0_i32_0 = arith.constant 0 : i32
    return %arg0, %c0_i32 : i32, i32
  }
  func.func @transform_1(%arg0: i32) -> (i32, i32) {
    %c0_i32 = arith.constant 0 : i32
    %c0_i32_0 = arith.constant 0 : i32
    %c0_i32_1 = arith.constant 0 : i32
    return %c0_i32, %c0_i32_0 : i32, i32
  }
  func.func @transform_2(%arg0: i32) -> (i32, i32) {
    %c0_i32 = arith.constant 0 : i32
    %c0_i32_0 = arith.constant 0 : i32
    return %arg0, %c0_i32 : i32, i32
  }
}

</mosaic_0001>

<llo_original>
// kernel: conv1x1_batchnorm.3
$region0: #{conv1x1_batchnorm.3}
  #allocation0 [shape = 'u32[]', space=smem, size = 0x4, offset = 0x4, fixed_abs, tag = 'smem constant byte address 0x4 - core index']
  #allocation1 [shape = 'u32[72,128]{1,0:T(1,128)}', space=vmem, size = 0x9000, scoped, tag = 'internal scratch']
  %s0 = inlined_call_operand.vmem [shape: f32[256,192], index: 0, kind: input, shape index: {}]
  %s1 = inlined_call_operand.vmem [shape: f32[2,192], index: 1, kind: input, shape index: {}]
  %s2 = inlined_call_operand.vmem [shape: f32[256,192], index: 2, kind: output, shape index: {}]
  %s3 = sld [smem:[#allocation0]]
  $region18: #{conv1x1_batchnorm.3} parent=0
    _
  %s5 = ssub.s32 1, %s3
  %s6 = scalar_select 0, %s5, %s3
  // Predicated region
  $region2: #{conv1x1_batchnorm.3} parent=0 // pred_check
    _
  $region3: #{conv1x1_batchnorm.3} parent=0 // pred_check_branch
    %8 = sbr.rel (0) target = $region5
  $region4: #{conv1x1_batchnorm.3} parent=0 // pred_region
    _
  $region5: #{conv1x1_batchnorm.3} parent=0 // pred_fallthru
    _
  // Predicated region
  $region6: #{conv1x1_batchnorm.3} parent=0 // pred_check
    _
  $region7: #{conv1x1_batchnorm.3} parent=0 // pred_check_branch
    %10 = sbr.rel (0) target = $region9
  $region8: #{conv1x1_batchnorm.3} parent=0 // pred_region
    _
  $region9: #{conv1x1_batchnorm.3} parent=0 // pred_fallthru
    _
  %v11 = vld [vmem:[%s1] sm:$0xf]
  %v12 = vld [vmem:[%s0] sm:$0xff]
  %v13 = vld [vmem:[%s0 + $0x8] sm:$0xff]
  %v14 = vld [vmem:[%s0 + $0x10] sm:$0xff]
  %v15 = vld [vmem:[%s0 + $0x18] sm:$0xff]
  %v16 = vld [vmem:[%s0 + $0x20] sm:$0xff]
  %v17 = vld [vmem:[%s0 + $0x28] sm:$0xff]
  %v18 = vld [vmem:[%s0 + $0x30] sm:$0xff]
  %v19 = vld [vmem:[%s0 + $0x38] sm:$0xff]
  %v20 = vld [vmem:[%s0 + $0x40] sm:$0xff]
  %v21 = vld [vmem:[%s0 + $0x48] sm:$0xff]
  %v22 = vld [vmem:[%s0 + $0x50] sm:$0xff]
  %v23 = vld [vmem:[%s0 + $0x58] sm:$0xff]
  %v24 = vld [vmem:[%s0 + $0x60] sm:$0xff]
  %v25 = vld [vmem:[%s0 + $0x68] sm:$0xff]
  %v26 = vld [vmem:[%s0 + $0x70] sm:$0xff]
  %v27 = vld [vmem:[%s0 + $0x78] sm:$0xff]
  %v28 = vld [vmem:[%s0 + $0x80] sm:$0xff]
  %v29 = vld [vmem:[%s0 + $0x88] sm:$0xff]
  %v30 = vld [vmem:[%s0 + $0x90] sm:$0xff]
  %v31 = vld [vmem:[%s0 + $0x98] sm:$0xff]
  %v32 = vld [vmem:[%s0 + $0xa0] sm:$0xff]
  %v33 = vld [vmem:[%s0 + $0xa8] sm:$0xff]
  %v34 = vld [vmem:[%s0 + $0xb0] sm:$0xff]
  %v35 = vld [vmem:[%s0 + $0xb8] sm:$0xff]
  %v36 = vld [vmem:[%s0 + $0xc0] sm:$0xff]
  %v37 = vld [vmem:[%s0 + $0xc8] sm:$0xff]
  %v38 = vld [vmem:[%s0 + $0xd0] sm:$0xff]
  %v39 = vld [vmem:[%s0 + $0xd8] sm:$0xff]
  %v40 = vld [vmem:[%s0 + $0xe0] sm:$0xff]
  %v41 = vld [vmem:[%s0 + $0xe8] sm:$0xff]
  %v42 = vld [vmem:[%s0 + $0xf0] sm:$0xff]
  %v43 = vld [vmem:[%s0 + $0xf8] sm:$0xff]
  %v44 = vld [vmem:[%s0 + $0x100] sm:$0xff]
  %v45 = vld [vmem:[%s0 + $0x108] sm:$0xff]
  %v46 = vld [vmem:[%s0 + $0x110] sm:$0xff]
  %v47 = vld [vmem:[%s0 + $0x118] sm:$0xff]
  %v48 = vld [vmem:[%s0 + $0x120] sm:$0xff]
  %v49 = vld [vmem:[%s0 + $0x128] sm:$0xff]
  %v50 = vld [vmem:[%s0 + $0x130] sm:$0xff]
  %v51 = vld [vmem:[%s0 + $0x138] sm:$0xff]
  %v52 = vld [vmem:[%s0 + $0x140] sm:$0xff]
  %v53 = vld [vmem:[%s0 + $0x148] sm:$0xff]
  %v54 = vld [vmem:[%s0 + $0x150] sm:$0xff]
  %v55 = vld [vmem:[%s0 + $0x158] sm:$0xff]
  %v56 = vld [vmem:[%s0 + $0x160] sm:$0xff]
  %v57 = vld [vmem:[%s0 + $0x168] sm:$0xff]
  %v58 = vld [vmem:[%s0 + $0x170] sm:$0xff]
  %v59 = vld [vmem:[%s0 + $0x178] sm:$0xff]
  %v60 = vld [vmem:[%s0 + $0x180] sm:$0xff]
  %v61 = vld [vmem:[%s0 + $0x188] sm:$0xff]
  %v62 = vld [vmem:[%s0 + $0x190] sm:$0xff]
  %v63 = vld [vmem:[%s0 + $0x198] sm:$0xff]
  %v64 = vld [vmem:[%s0 + $0x1a0] sm:$0xff]
  %v65 = vld [vmem:[%s0 + $0x1a8] sm:$0xff]
  %v66 = vld [vmem:[%s0 + $0x1b0] sm:$0xff]
  %v67 = vld [vmem:[%s0 + $0x1b8] sm:$0xff]
  %v68 = vld [vmem:[%s0 + $0x1c0] sm:$0xff]
  %v69 = vld [vmem:[%s0 + $0x1c8] sm:$0xff]
  %v70 = vld [vmem:[%s0 + $0x1d0] sm:$0xff]
  %v71 = vld [vmem:[%s0 + $0x1d8] sm:$0xff]
  %v72 = vld [vmem:[%s0 + $0x1e0] sm:$0xff]
  %v73 = vld [vmem:[%s0 + $0x1e8] sm:$0xff]
  %v74 = vld [vmem:[%s0 + $0x1f0] sm:$0xff]
  %v75 = vld [vmem:[%s0 + $0x1f8] sm:$0xff]
  %v77 = vperm.slane %v11, 0
  %v78 = vperm.slane %v11, 2
  %v81 = vperm.slane %v77, 0
  %v82 = vperm.slane %v78, 0
  %v83 = vmul.f32 %v12, %v81
  %v84 = vmul.f32 %v13, %v82
  %v85 = vmul.f32 %v14, %v81
  %v86 = vmul.f32 %v15, %v82
  %v87 = vmul.f32 %v16, %v81
  %v88 = vmul.f32 %v17, %v82
  %v89 = vmul.f32 %v18, %v81
  %v90 = vmul.f32 %v19, %v82
  %v91 = vmul.f32 %v20, %v81
  %v92 = vmul.f32 %v21, %v82
  %v93 = vmul.f32 %v22, %v81
  %v94 = vmul.f32 %v23, %v82
  %v95 = vmul.f32 %v24, %v81
  %v96 = vmul.f32 %v25, %v82
  %v97 = vmul.f32 %v26, %v81
  %v98 = vmul.f32 %v27, %v82
  %v99 = vmul.f32 %v28, %v81
  %v100 = vmul.f32 %v29, %v82
  %v101 = vmul.f32 %v30, %v81
  %v102 = vmul.f32 %v31, %v82
  %v103 = vmul.f32 %v32, %v81
  %v104 = vmul.f32 %v33, %v82
  %v105 = vmul.f32 %v34, %v81
  %v106 = vmul.f32 %v35, %v82
  %v107 = vmul.f32 %v36, %v81
  %v108 = vmul.f32 %v37, %v82
  %v109 = vmul.f32 %v38, %v81
  %v110 = vmul.f32 %v39, %v82
  %v111 = vmul.f32 %v40, %v81
  %v112 = vmul.f32 %v41, %v82
  %v113 = vmul.f32 %v42, %v81
  %v114 = vmul.f32 %v43, %v82
  %v115 = vmul.f32 %v44, %v81
  %v116 = vmul.f32 %v45, %v82
  %v117 = vmul.f32 %v46, %v81
  %v118 = vmul.f32 %v47, %v82
  %v119 = vmul.f32 %v48, %v81
  %v120 = vmul.f32 %v49, %v82
  %v121 = vmul.f32 %v50, %v81
  %v122 = vmul.f32 %v51, %v82
  %v123 = vmul.f32 %v52, %v81
  %v124 = vmul.f32 %v53, %v82
  %v125 = vmul.f32 %v54, %v81
  %v126 = vmul.f32 %v55, %v82
  %v127 = vmul.f32 %v56, %v81
  %v128 = vmul.f32 %v57, %v82
  %v129 = vmul.f32 %v58, %v81
  %v130 = vmul.f32 %v59, %v82
  %v131 = vmul.f32 %v60, %v81
  %v132 = vmul.f32 %v61, %v82
  %v133 = vmul.f32 %v62, %v81
  %v134 = vmul.f32 %v63, %v82
  %v135 = vmul.f32 %v64, %v81
  %v136 = vmul.f32 %v65, %v82
  %v137 = vmul.f32 %v66, %v81
  %v138 = vmul.f32 %v67, %v82
  %v139 = vmul.f32 %v68, %v81
  %v140 = vmul.f32 %v69, %v82
  %v141 = vmul.f32 %v70, %v81
  %v142 = vmul.f32 %v71, %v82
  %v143 = vmul.f32 %v72, %v81
  %v144 = vmul.f32 %v73, %v82
  %v145 = vmul.f32 %v74, %v81
  %v146 = vmul.f32 %v75, %v82
  %v147 = vperm.slane %v11, 1
  %v148 = vperm.slane %v11, 3
  %v151 = vperm.slane %v147, 1
  %v152 = vperm.slane %v148, 1
  %v153 = vadd.f32 %v83, %v151
  %v154 = vadd.f32 %v84, %v152
  %v155 = vadd.f32 %v85, %v151
  %v156 = vadd.f32 %v86, %v152
  %v157 = vadd.f32 %v87, %v151
  %v158 = vadd.f32 %v88, %v152
  %v159 = vadd.f32 %v89, %v151
  %v160 = vadd.f32 %v90, %v152
  %v161 = vadd.f32 %v91, %v151
  %v162 = vadd.f32 %v92, %v152
  %v163 = vadd.f32 %v93, %v151
  %v164 = vadd.f32 %v94, %v152
  %v165 = vadd.f32 %v95, %v151
  %v166 = vadd.f32 %v96, %v152
  %v167 = vadd.f32 %v97, %v151
  %v168 = vadd.f32 %v98, %v152
  %v169 = vadd.f32 %v99, %v151
  %v170 = vadd.f32 %v100, %v152
  %v171 = vadd.f32 %v101, %v151
  %v172 = vadd.f32 %v102, %v152
  %v173 = vadd.f32 %v103, %v151
  %v174 = vadd.f32 %v104, %v152
  %v175 = vadd.f32 %v105, %v151
  %v176 = vadd.f32 %v106, %v152
  %v177 = vadd.f32 %v107, %v151
  %v178 = vadd.f32 %v108, %v152
  %v179 = vadd.f32 %v109, %v151
  %v180 = vadd.f32 %v110, %v152
  %v181 = vadd.f32 %v111, %v151
  %v182 = vadd.f32 %v112, %v152
  %v183 = vadd.f32 %v113, %v151
  %v184 = vadd.f32 %v114, %v152
  %v185 = vadd.f32 %v115, %v151
  %v186 = vadd.f32 %v116, %v152
  %v187 = vadd.f32 %v117, %v151
  %v188 = vadd.f32 %v118, %v152
  %v189 = vadd.f32 %v119, %v151
  %v190 = vadd.f32 %v120, %v152
  %v191 = vadd.f32 %v121, %v151
  %v192 = vadd.f32 %v122, %v152
  %v193 = vadd.f32 %v123, %v151
  %v194 = vadd.f32 %v124, %v152
  %v195 = vadd.f32 %v125, %v151
  %v196 = vadd.f32 %v126, %v152
  %v197 = vadd.f32 %v127, %v151
  %v198 = vadd.f32 %v128, %v152
  %v199 = vadd.f32 %v129, %v151
  %v200 = vadd.f32 %v130, %v152
  %v201 = vadd.f32 %v131, %v151
  %v202 = vadd.f32 %v132, %v152
  %v203 = vadd.f32 %v133, %v151
  %v204 = vadd.f32 %v134, %v152
  %v205 = vadd.f32 %v135, %v151
  %v206 = vadd.f32 %v136, %v152
  %v207 = vadd.f32 %v137, %v151
  %v208 = vadd.f32 %v138, %v152
  %v209 = vadd.f32 %v139, %v151
  %v210 = vadd.f32 %v140, %v152
  %v211 = vadd.f32 %v141, %v151
  %v212 = vadd.f32 %v142, %v152
  %v213 = vadd.f32 %v143, %v151
  %v214 = vadd.f32 %v144, %v152
  %v215 = vadd.f32 %v145, %v151
  %v216 = vadd.f32 %v146, %v152
  %217 = vst [vmem:[%s2] sm:$0xff] %v153
  %vm218 = vcmask 523264
  %219 = vst.msk [vmem:[%s2 + $0x8] sm:$0xff] %vm218, %v154
  %220 = vst [vmem:[%s2 + $0x10] sm:$0xff] %v155
  %221 = vst.msk [vmem:[%s2 + $0x18] sm:$0xff] %vm218, %v156
  %222 = vst [vmem:[%s2 + $0x20] sm:$0xff] %v157
  %223 = vst.msk [vmem:[%s2 + $0x28] sm:$0xff] %vm218, %v158
  %224 = vst [vmem:[%s2 + $0x30] sm:$0xff] %v159
  %225 = vst.msk [vmem:[%s2 + $0x38] sm:$0xff] %vm218, %v160
  %226 = vst [vmem:[%s2 + $0x40] sm:$0xff] %v161
  %227 = vst.msk [vmem:[%s2 + $0x48] sm:$0xff] %vm218, %v162
  %228 = vst [vmem:[%s2 + $0x50] sm:$0xff] %v163
  %229 = vst.msk [vmem:[%s2 + $0x58] sm:$0xff] %vm218, %v164
  %230 = vst [vmem:[%s2 + $0x60] sm:$0xff] %v165
  %231 = vst.msk [vmem:[%s2 + $0x68] sm:$0xff] %vm218, %v166
  %232 = vst [vmem:[%s2 + $0x70] sm:$0xff] %v167
  %233 = vst.msk [vmem:[%s2 + $0x78] sm:$0xff] %vm218, %v168
  %234 = vst [vmem:[%s2 + $0x80] sm:$0xff] %v169
  %235 = vst.msk [vmem:[%s2 + $0x88] sm:$0xff] %vm218, %v170
  %236 = vst [vmem:[%s2 + $0x90] sm:$0xff] %v171
  %237 = vst.msk [vmem:[%s2 + $0x98] sm:$0xff] %vm218, %v172
  %238 = vst [vmem:[%s2 + $0xa0] sm:$0xff] %v173
  %239 = vst.msk [vmem:[%s2 + $0xa8] sm:$0xff] %vm218, %v174
  %240 = vst [vmem:[%s2 + $0xb0] sm:$0xff] %v175
  %241 = vst.msk [vmem:[%s2 + $0xb8] sm:$0xff] %vm218, %v176
  %242 = vst [vmem:[%s2 + $0xc0] sm:$0xff] %v177
  %243 = vst.msk [vmem:[%s2 + $0xc8] sm:$0xff] %vm218, %v178
  %244 = vst [vmem:[%s2 + $0xd0] sm:$0xff] %v179
  %245 = vst.msk [vmem:[%s2 + $0xd8] sm:$0xff] %vm218, %v180
  %246 = vst [vmem:[%s2 + $0xe0] sm:$0xff] %v181
  %247 = vst.msk [vmem:[%s2 + $0xe8] sm:$0xff] %vm218, %v182
  %248 = vst [vmem:[%s2 + $0xf0] sm:$0xff] %v183
  %249 = vst.msk [vmem:[%s2 + $0xf8] sm:$0xff] %vm218, %v184
  %250 = vst [vmem:[%s2 + $0x100] sm:$0xff] %v185
  %251 = vst.msk [vmem:[%s2 + $0x108] sm:$0xff] %vm218, %v186
  %252 = vst [vmem:[%s2 + $0x110] sm:$0xff] %v187
  %253 = vst.msk [vmem:[%s2 + $0x118] sm:$0xff] %vm218, %v188
  %254 = vst [vmem:[%s2 + $0x120] sm:$0xff] %v189
  %255 = vst.msk [vmem:[%s2 + $0x128] sm:$0xff] %vm218, %v190
  %256 = vst [vmem:[%s2 + $0x130] sm:$0xff] %v191
  %257 = vst.msk [vmem:[%s2 + $0x138] sm:$0xff] %vm218, %v192
  %258 = vst [vmem:[%s2 + $0x140] sm:$0xff] %v193
  %259 = vst.msk [vmem:[%s2 + $0x148] sm:$0xff] %vm218, %v194
  %260 = vst [vmem:[%s2 + $0x150] sm:$0xff] %v195
  %261 = vst.msk [vmem:[%s2 + $0x158] sm:$0xff] %vm218, %v196
  %262 = vst [vmem:[%s2 + $0x160] sm:$0xff] %v197
  %263 = vst.msk [vmem:[%s2 + $0x168] sm:$0xff] %vm218, %v198
  %264 = vst [vmem:[%s2 + $0x170] sm:$0xff] %v199
  %265 = vst.msk [vmem:[%s2 + $0x178] sm:$0xff] %vm218, %v200
  %266 = vst [vmem:[%s2 + $0x180] sm:$0xff] %v201
  %267 = vst.msk [vmem:[%s2 + $0x188] sm:$0xff] %vm218, %v202
  %268 = vst [vmem:[%s2 + $0x190] sm:$0xff] %v203
  %269 = vst.msk [vmem:[%s2 + $0x198] sm:$0xff] %vm218, %v204
  %270 = vst [vmem:[%s2 + $0x1a0] sm:$0xff] %v205
  %271 = vst.msk [vmem:[%s2 + $0x1a8] sm:$0xff] %vm218, %v206
  %272 = vst [vmem:[%s2 + $0x1b0] sm:$0xff] %v207
  %273 = vst.msk [vmem:[%s2 + $0x1b8] sm:$0xff] %vm218, %v208
  %274 = vst [vmem:[%s2 + $0x1c0] sm:$0xff] %v209
  %275 = vst.msk [vmem:[%s2 + $0x1c8] sm:$0xff] %vm218, %v210
  %276 = vst [vmem:[%s2 + $0x1d0] sm:$0xff] %v211
  %277 = vst.msk [vmem:[%s2 + $0x1d8] sm:$0xff] %vm218, %v212
  %278 = vst [vmem:[%s2 + $0x1e0] sm:$0xff] %v213
  %279 = vst.msk [vmem:[%s2 + $0x1e8] sm:$0xff] %vm218, %v214
  %280 = vst [vmem:[%s2 + $0x1f0] sm:$0xff] %v215
  %281 = vst.msk [vmem:[%s2 + $0x1f8] sm:$0xff] %vm218, %v216
  // Predicated region
  $region10: #{conv1x1_batchnorm.3} parent=0 // pred_check
    _
  $region11: #{conv1x1_batchnorm.3} parent=0 // pred_check_branch
    %283 = sbr.rel (0) target = $region13
  $region12: #{conv1x1_batchnorm.3} parent=0 // pred_region
    _
  $region13: #{conv1x1_batchnorm.3} parent=0 // pred_fallthru
    _
  // Predicated region
  $region14: #{conv1x1_batchnorm.3} parent=0 // pred_check
    _
  $region15: #{conv1x1_batchnorm.3} parent=0 // pred_check_branch
    %285 = sbr.rel (0) target = $region17
  $region16: #{conv1x1_batchnorm.3} parent=0 // pred_region
    _
  $region17: #{conv1x1_batchnorm.3} parent=0 // pred_fallthru
    _

// kernel: conv1x1_batchnorm.2
$region0: #{conv1x1_batchnorm.2}
  #allocation0 [shape = 'u32[]', space=smem, size = 0x4, offset = 0x4, fixed_abs, tag = 'smem constant byte address 0x4 - core index']
  #allocation1 [shape = 'u32[72,128]{1,0:T(1,128)}', space=vmem, size = 0x9000, scoped, tag = 'internal scratch']
  %s0 = inlined_call_operand.vmem [shape: bf16[256,768], index: 0, kind: input, shape index: {}]
  %s1 = inlined_call_operand.vmem [shape: bf16[768,192], index: 1, kind: input, shape index: {}]
  %s2 = inlined_call_operand.vmem [shape: f32[256,192], index: 2, kind: output, shape index: {0}]
  %s3 = inlined_call_operand.vmem [shape: f32[1,2,192], index: 3, kind: output, shape index: {1}]
  %4 = xla_tuple %s2, %s3
  %s5 = sld [smem:[#allocation0]]
  $region26: #{conv1x1_batchnorm.2} parent=0
    _
  %s7 = ssub.s32 1, %s5
  %s8 = scalar_select 0, %s7, %s5
  // Predicated region
  $region2: #{conv1x1_batchnorm.2} parent=0 // pred_check
    _
  $region3: #{conv1x1_batchnorm.2} parent=0 // pred_check_branch
    %10 = sbr.rel (0) target = $region5
  $region4: #{conv1x1_batchnorm.2} parent=0 // pred_region
    _
  $region5: #{conv1x1_batchnorm.2} parent=0 // pred_fallthru
    _
  // Predicated region
  $region6: #{conv1x1_batchnorm.2} parent=0 // pred_check
    _
  $region7: #{conv1x1_batchnorm.2} parent=0 // pred_check_branch
    %12 = sbr.rel (0) target = $region9
  $region8: #{conv1x1_batchnorm.2} parent=0 // pred_region
    _
  $region9: #{conv1x1_batchnorm.2} parent=0 // pred_fallthru
    _
  %v13 = vld [vmem:[%s0] sm:$0xff]
  %v14 = vld [vmem:[%s0 + $0x8] sm:$0xff]
  %v15 = vld [vmem:[%s0 + $0x10] sm:$0xff]
  %v16 = vld [vmem:[%s0 + $0x18] sm:$0xff]
  %v17 = vld [vmem:[%s0 + $0x20] sm:$0xff]
  %v18 = vld [vmem:[%s0 + $0x28] sm:$0xff]
  %v19 = vld [vmem:[%s0 + $0x30] sm:$0xff]
  %v20 = vld [vmem:[%s0 + $0x38] sm:$0xff]
  %v21 = vld [vmem:[%s0 + $0x40] sm:$0xff]
  %v22 = vld [vmem:[%s0 + $0x48] sm:$0xff]
  %v23 = vld [vmem:[%s0 + $0x50] sm:$0xff]
  %v24 = vld [vmem:[%s0 + $0x58] sm:$0xff]
  %v25 = vld [vmem:[%s0 + $0x60] sm:$0xff]
  %v26 = vld [vmem:[%s0 + $0x68] sm:$0xff]
  %v27 = vld [vmem:[%s0 + $0x70] sm:$0xff]
  %v28 = vld [vmem:[%s0 + $0x78] sm:$0xff]
  %v29 = vld [vmem:[%s0 + $0x80] sm:$0xff]
  %v30 = vld [vmem:[%s0 + $0x88] sm:$0xff]
  %v31 = vld [vmem:[%s0 + $0x90] sm:$0xff]
  %v32 = vld [vmem:[%s0 + $0x98] sm:$0xff]
  %v33 = vld [vmem:[%s0 + $0xa0] sm:$0xff]
  %v34 = vld [vmem:[%s0 + $0xa8] sm:$0xff]
  %v35 = vld [vmem:[%s0 + $0xb0] sm:$0xff]
  %v36 = vld [vmem:[%s0 + $0xb8] sm:$0xff]
  %v37 = vld [vmem:[%s0 + $0xc0] sm:$0xff]
  %v38 = vld [vmem:[%s0 + $0xc8] sm:$0xff]
  %v39 = vld [vmem:[%s0 + $0xd0] sm:$0xff]
  %v40 = vld [vmem:[%s0 + $0xd8] sm:$0xff]
  %v41 = vld [vmem:[%s0 + $0xe0] sm:$0xff]
  %v42 = vld [vmem:[%s0 + $0xe8] sm:$0xff]
  %v43 = vld [vmem:[%s0 + $0xf0] sm:$0xff]
  %v44 = vld [vmem:[%s0 + $0xf8] sm:$0xff]
  %v45 = vld [vmem:[%s0 + $0x100] sm:$0xff]
  %v46 = vld [vmem:[%s0 + $0x108] sm:$0xff]
  %v47 = vld [vmem:[%s0 + $0x110] sm:$0xff]
  %v48 = vld [vmem:[%s0 + $0x118] sm:$0xff]
  %v49 = vld [vmem:[%s0 + $0x120] sm:$0xff]
  %v50 = vld [vmem:[%s0 + $0x128] sm:$0xff]
  %v51 = vld [vmem:[%s0 + $0x130] sm:$0xff]
  %v52 = vld [vmem:[%s0 + $0x138] sm:$0xff]
  %v53 = vld [vmem:[%s0 + $0x140] sm:$0xff]
  %v54 = vld [vmem:[%s0 + $0x148] sm:$0xff]
  %v55 = vld [vmem:[%s0 + $0x150] sm:$0xff]
  %v56 = vld [vmem:[%s0 + $0x158] sm:$0xff]
  %v57 = vld [vmem:[%s0 + $0x160] sm:$0xff]
  %v58 = vld [vmem:[%s0 + $0x168] sm:$0xff]
  %v59 = vld [vmem:[%s0 + $0x170] sm:$0xff]
  %v60 = vld [vmem:[%s0 + $0x178] sm:$0xff]
  %v61 = vld [vmem:[%s0 + $0x180] sm:$0xff]
  %v62 = vld [vmem:[%s0 + $0x188] sm:$0xff]
  %v63 = vld [vmem:[%s0 + $0x190] sm:$0xff]
  %v64 = vld [vmem:[%s0 + $0x198] sm:$0xff]
  %v65 = vld [vmem:[%s0 + $0x1a0] sm:$0xff]
  %v66 = vld [vmem:[%s0 + $0x1a8] sm:$0xff]
  %v67 = vld [vmem:[%s0 + $0x1b0] sm:$0xff]
  %v68 = vld [vmem:[%s0 + $0x1b8] sm:$0xff]
  %v69 = vld [vmem:[%s0 + $0x1c0] sm:$0xff]
  %v70 = vld [vmem:[%s0 + $0x1c8] sm:$0xff]
  %v71 = vld [vmem:[%s0 + $0x1d0] sm:$0xff]
  %v72 = vld [vmem:[%s0 + $0x1d8] sm:$0xff]
  %v73 = vld [vmem:[%s0 + $0x1e0] sm:$0xff]
  %v74 = vld [vmem:[%s0 + $0x1e8] sm:$0xff]
  %v75 = vld [vmem:[%s0 + $0x1f0] sm:$0xff]
  %v76 = vld [vmem:[%s0 + $0x1f8] sm:$0xff]
  %v77 = vld [vmem:[%s0 + $0x200] sm:$0xff]
  %v78 = vld [vmem:[%s0 + $0x208] sm:$0xff]
  %v79 = vld [vmem:[%s0 + $0x210] sm:$0xff]
  %v80 = vld [vmem:[%s0 + $0x218] sm:$0xff]
  %v81 = vld [vmem:[%s0 + $0x220] sm:$0xff]
  %v82 = vld [vmem:[%s0 + $0x228] sm:$0xff]
  %v83 = vld [vmem:[%s0 + $0x230] sm:$0xff]
  %v84 = vld [vmem:[%s0 + $0x238] sm:$0xff]
  %v85 = vld [vmem:[%s0 + $0x240] sm:$0xff]
  %v86 = vld [vmem:[%s0 + $0x248] sm:$0xff]
  %v87 = vld [vmem:[%s0 + $0x250] sm:$0xff]
  %v88 = vld [vmem:[%s0 + $0x258] sm:$0xff]
  %v89 = vld [vmem:[%s0 + $0x260] sm:$0xff]
  %v90 = vld [vmem:[%s0 + $0x268] sm:$0xff]
  %v91 = vld [vmem:[%s0 + $0x270] sm:$0xff]
  %v92 = vld [vmem:[%s0 + $0x278] sm:$0xff]
  %v93 = vld [vmem:[%s0 + $0x280] sm:$0xff]
  %v94 = vld [vmem:[%s0 + $0x288] sm:$0xff]
  %v95 = vld [vmem:[%s0 + $0x290] sm:$0xff]
  %v96 = vld [vmem:[%s0 + $0x298] sm:$0xff]
  %v97 = vld [vmem:[%s0 + $0x2a0] sm:$0xff]
  %v98 = vld [vmem:[%s0 + $0x2a8] sm:$0xff]
  %v99 = vld [vmem:[%s0 + $0x2b0] sm:$0xff]
  %v100 = vld [vmem:[%s0 + $0x2b8] sm:$0xff]
  %v101 = vld [vmem:[%s0 + $0x2c0] sm:$0xff]
  %v102 = vld [vmem:[%s0 + $0x2c8] sm:$0xff]
  %v103 = vld [vmem:[%s0 + $0x2d0] sm:$0xff]
  %v104 = vld [vmem:[%s0 + $0x2d8] sm:$0xff]
  %v105 = vld [vmem:[%s0 + $0x2e0] sm:$0xff]
  %v106 = vld [vmem:[%s0 + $0x2e8] sm:$0xff]
  %v107 = vld [vmem:[%s0 + $0x2f0] sm:$0xff]
  %v108 = vld [vmem:[%s0 + $0x2f8] sm:$0xff]
  %v109 = vld [vmem:[%s1] sm:$0xff]
  %v110 = vld [vmem:[%s1 + $0x8] sm:$0xff]
  %v111 = vld [vmem:[%s1 + $0x10] sm:$0xff]
  %v112 = vld [vmem:[%s1 + $0x18] sm:$0xff]
  %v113 = vld [vmem:[%s1 + $0x20] sm:$0xff]
  %v114 = vld [vmem:[%s1 + $0x28] sm:$0xff]
  %v115 = vld [vmem:[%s1 + $0x30] sm:$0xff]
  %v116 = vld [vmem:[%s1 + $0x38] sm:$0xff]
  %v117 = vld [vmem:[%s1 + $0x40] sm:$0xff]
  %v118 = vld [vmem:[%s1 + $0x48] sm:$0xff]
  %v119 = vld [vmem:[%s1 + $0x50] sm:$0xff]
  %v120 = vld [vmem:[%s1 + $0x58] sm:$0xff]
  %v121 = vld [vmem:[%s1 + $0x60] sm:$0xff]
  %v122 = vld [vmem:[%s1 + $0x68] sm:$0xff]
  %v123 = vld [vmem:[%s1 + $0x70] sm:$0xff]
  %v124 = vld [vmem:[%s1 + $0x78] sm:$0xff]
  %v125 = vld [vmem:[%s1 + $0x80] sm:$0xff]
  %v126 = vld [vmem:[%s1 + $0x88] sm:$0xff]
  %v127 = vld [vmem:[%s1 + $0x90] sm:$0xff]
  %v128 = vld [vmem:[%s1 + $0x98] sm:$0xff]
  %v129 = vld [vmem:[%s1 + $0xa0] sm:$0xff]
  %v130 = vld [vmem:[%s1 + $0xa8] sm:$0xff]
  %v131 = vld [vmem:[%s1 + $0xb0] sm:$0xff]
  %v132 = vld [vmem:[%s1 + $0xb8] sm:$0xff]
  %v133 = vld [vmem:[%s1 + $0xc0] sm:$0xff]
  %v134 = vld [vmem:[%s1 + $0xc8] sm:$0xff]
  %v135 = vld [vmem:[%s1 + $0xd0] sm:$0xff]
  %v136 = vld [vmem:[%s1 + $0xd8] sm:$0xff]
  %v137 = vld [vmem:[%s1 + $0xe0] sm:$0xff]
  %v138 = vld [vmem:[%s1 + $0xe8] sm:$0xff]
  %v139 = vld [vmem:[%s1 + $0xf0] sm:$0xff]
  %v140 = vld [vmem:[%s1 + $0xf8] sm:$0xff]
  %v141 = vld [vmem:[%s1 + $0x100] sm:$0xff]
  %v142 = vld [vmem:[%s1 + $0x108] sm:$0xff]
  %v143 = vld [vmem:[%s1 + $0x110] sm:$0xff]
  %v144 = vld [vmem:[%s1 + $0x118] sm:$0xff]
  %v145 = vld [vmem:[%s1 + $0x120] sm:$0xff]
  %v146 = vld [vmem:[%s1 + $0x128] sm:$0xff]
  %v147 = vld [vmem:[%s1 + $0x130] sm:$0xff]
  %v148 = vld [vmem:[%s1 + $0x138] sm:$0xff]
  %v149 = vld [vmem:[%s1 + $0x140] sm:$0xff]
  %v150 = vld [vmem:[%s1 + $0x148] sm:$0xff]
  %v151 = vld [vmem:[%s1 + $0x150] sm:$0xff]
  %v152 = vld [vmem:[%s1 + $0x158] sm:$0xff]
  %v153 = vld [vmem:[%s1 + $0x160] sm:$0xff]
  %v154 = vld [vmem:[%s1 + $0x168] sm:$0xff]
  %v155 = vld [vmem:[%s1 + $0x170] sm:$0xff]
  %v156 = vld [vmem:[%s1 + $0x178] sm:$0xff]
  %v157 = vld [vmem:[%s1 + $0x180] sm:$0xff]
  %v158 = vld [vmem:[%s1 + $0x188] sm:$0xff]
  %v159 = vld [vmem:[%s1 + $0x190] sm:$0xff]
  %v160 = vld [vmem:[%s1 + $0x198] sm:$0xff]
  %v161 = vld [vmem:[%s1 + $0x1a0] sm:$0xff]
  %v162 = vld [vmem:[%s1 + $0x1a8] sm:$0xff]
  %v163 = vld [vmem:[%s1 + $0x1b0] sm:$0xff]
  %v164 = vld [vmem:[%s1 + $0x1b8] sm:$0xff]
  %v165 = vld [vmem:[%s1 + $0x1c0] sm:$0xff]
  %v166 = vld [vmem:[%s1 + $0x1c8] sm:$0xff]
  %v167 = vld [vmem:[%s1 + $0x1d0] sm:$0xff]
  %v168 = vld [vmem:[%s1 + $0x1d8] sm:$0xff]
  %v169 = vld [vmem:[%s1 + $0x1e0] sm:$0xff]
  %v170 = vld [vmem:[%s1 + $0x1e8] sm:$0xff]
  %v171 = vld [vmem:[%s1 + $0x1f0] sm:$0xff]
  %v172 = vld [vmem:[%s1 + $0x1f8] sm:$0xff]
  %v173 = vld [vmem:[%s1 + $0x200] sm:$0xff]
  %v174 = vld [vmem:[%s1 + $0x208] sm:$0xff]
  %v175 = vld [vmem:[%s1 + $0x210] sm:$0xff]
  %v176 = vld [vmem:[%s1 + $0x218] sm:$0xff]
  %v177 = vld [vmem:[%s1 + $0x220] sm:$0xff]
  %v178 = vld [vmem:[%s1 + $0x228] sm:$0xff]
  %v179 = vld [vmem:[%s1 + $0x230] sm:$0xff]
  %v180 = vld [vmem:[%s1 + $0x238] sm:$0xff]
  %v181 = vld [vmem:[%s1 + $0x240] sm:$0xff]
  %v182 = vld [vmem:[%s1 + $0x248] sm:$0xff]
  %v183 = vld [vmem:[%s1 + $0x250] sm:$0xff]
  %v184 = vld [vmem:[%s1 + $0x258] sm:$0xff]
  %v185 = vld [vmem:[%s1 + $0x260] sm:$0xff]
  %v186 = vld [vmem:[%s1 + $0x268] sm:$0xff]
  %v187 = vld [vmem:[%s1 + $0x270] sm:$0xff]
  %v188 = vld [vmem:[%s1 + $0x278] sm:$0xff]
  %v189 = vld [vmem:[%s1 + $0x280] sm:$0xff]
  %v190 = vld [vmem:[%s1 + $0x288] sm:$0xff]
  %v191 = vld [vmem:[%s1 + $0x290] sm:$0xff]
  %v192 = vld [vmem:[%s1 + $0x298] sm:$0xff]
  %v193 = vld [vmem:[%s1 + $0x2a0] sm:$0xff]
  %v194 = vld [vmem:[%s1 + $0x2a8] sm:$0xff]
  %v195 = vld [vmem:[%s1 + $0x2b0] sm:$0xff]
  %v196 = vld [vmem:[%s1 + $0x2b8] sm:$0xff]
  %v197 = vld [vmem:[%s1 + $0x2c0] sm:$0xff]
  %v198 = vld [vmem:[%s1 + $0x2c8] sm:$0xff]
  %v199 = vld [vmem:[%s1 + $0x2d0] sm:$0xff]
  %v200 = vld [vmem:[%s1 + $0x2d8] sm:$0xff]
  %v201 = vld [vmem:[%s1 + $0x2e0] sm:$0xff]
  %v202 = vld [vmem:[%s1 + $0x2e8] sm:$0xff]
  %v203 = vld [vmem:[%s1 + $0x2f0] sm:$0xff]
  %v204 = vld [vmem:[%s1 + $0x2f8] sm:$0xff]
  %v301 = vunpack.c.l.b16 %v13
  %v302 = vunpack.c.h.b16 %v13
  %v303 = vunpack.c.l.b16 %v14
  %v304 = vunpack.c.h.b16 %v14
  %v305 = vunpack.c.l.b16 %v15
  %v306 = vunpack.c.h.b16 %v15
  %v307 = vunpack.c.l.b16 %v16
  %v308 = vunpack.c.h.b16 %v16
  %v309 = vunpack.c.l.b16 %v17
  %v310 = vunpack.c.h.b16 %v17
  %v311 = vunpack.c.l.b16 %v18
  %v312 = vunpack.c.h.b16 %v18
  %v313 = vunpack.c.l.b16 %v19
  %v314 = vunpack.c.h.b16 %v19
  %v315 = vunpack.c.l.b16 %v20
  %v316 = vunpack.c.h.b16 %v20
  %v317 = vunpack.c.l.b16 %v21
  %v318 = vunpack.c.h.b16 %v21
  %v319 = vunpack.c.l.b16 %v22
  %v320 = vunpack.c.h.b16 %v22
  %v321 = vunpack.c.l.b16 %v23
  %v322 = vunpack.c.h.b16 %v23
  %v323 = vunpack.c.l.b16 %v24
  %v324 = vunpack.c.h.b16 %v24
  %v325 = vunpack.c.l.b16 %v25
  %v326 = vunpack.c.h.b16 %v25
  %v327 = vunpack.c.l.b16 %v26
  %v328 = vunpack.c.h.b16 %v26
  %v329 = vunpack.c.l.b16 %v27
  %v330 = vunpack.c.h.b16 %v27
  %v331 = vunpack.c.l.b16 %v28
  %v332 = vunpack.c.h.b16 %v28
  %v333 = vunpack.c.l.b16 %v29
  %v334 = vunpack.c.h.b16 %v29
  %v335 = vunpack.c.l.b16 %v30
  %v336 = vunpack.c.h.b16 %v30
  %v337 = vunpack.c.l.b16 %v31
  %v338 = vunpack.c.h.b16 %v31
  %v339 = vunpack.c.l.b16 %v32
  %v340 = vunpack.c.h.b16 %v32
  %v341 = vunpack.c.l.b16 %v33
  %v342 = vunpack.c.h.b16 %v33
  %v343 = vunpack.c.l.b16 %v34
  %v344 = vunpack.c.h.b16 %v34
  %v345 = vunpack.c.l.b16 %v35
  %v346 = vunpack.c.h.b16 %v35
  %v347 = vunpack.c.l.b16 %v36
  %v348 = vunpack.c.h.b16 %v36
  %v349 = vunpack.c.l.b16 %v37
  %v350 = vunpack.c.h.b16 %v37
  %v351 = vunpack.c.l.b16 %v38
  %v352 = vunpack.c.h.b16 %v38
  %v353 = vunpack.c.l.b16 %v39
  %v354 = vunpack.c.h.b16 %v39
  %v355 = vunpack.c.l.b16 %v40
  %v356 = vunpack.c.h.b16 %v40
  %v357 = vunpack.c.l.b16 %v41
  %v358 = vunpack.c.h.b16 %v41
  %v359 = vunpack.c.l.b16 %v42
  %v360 = vunpack.c.h.b16 %v42
  %v361 = vunpack.c.l.b16 %v43
  %v362 = vunpack.c.h.b16 %v43
  %v363 = vunpack.c.l.b16 %v44
  %v364 = vunpack.c.h.b16 %v44
  %v365 = vunpack.c.l.b16 %v45
  %v366 = vunpack.c.h.b16 %v45
  %v367 = vunpack.c.l.b16 %v46
  %v368 = vunpack.c.h.b16 %v46
  %v369 = vunpack.c.l.b16 %v47
  %v370 = vunpack.c.h.b16 %v47
  %v371 = vunpack.c.l.b16 %v48
  %v372 = vunpack.c.h.b16 %v48
  %v373 = vunpack.c.l.b16 %v49
  %v374 = vunpack.c.h.b16 %v49
  %v375 = vunpack.c.l.b16 %v50
  %v376 = vunpack.c.h.b16 %v50
  %v377 = vunpack.c.l.b16 %v51
  %v378 = vunpack.c.h.b16 %v51
  %v379 = vunpack.c.l.b16 %v52
  %v380 = vunpack.c.h.b16 %v52
  %v381 = vunpack.c.l.b16 %v53
  %v382 = vunpack.c.h.b16 %v53
  %v383 = vunpack.c.l.b16 %v54
  %v384 = vunpack.c.h.b16 %v54
  %v385 = vunpack.c.l.b16 %v55
  %v386 = vunpack.c.h.b16 %v55
  %v387 = vunpack.c.l.b16 %v56
  %v388 = vunpack.c.h.b16 %v56
  %v389 = vunpack.c.l.b16 %v57
  %v390 = vunpack.c.h.b16 %v57
  %v391 = vunpack.c.l.b16 %v58
  %v392 = vunpack.c.h.b16 %v58
  %v393 = vunpack.c.l.b16 %v59
  %v394 = vunpack.c.h.b16 %v59
  %v395 = vunpack.c.l.b16 %v60
  %v396 = vunpack.c.h.b16 %v60
  %v397 = vunpack.c.l.b16 %v61
  %v398 = vunpack.c.h.b16 %v61
  %v399 = vunpack.c.l.b16 %v62
  %v400 = vunpack.c.h.b16 %v62
  %v401 = vunpack.c.l.b16 %v63
  %v402 = vunpack.c.h.b16 %v63
  %v403 = vunpack.c.l.b16 %v64
  %v404 = vunpack.c.h.b16 %v64
  %v405 = vunpack.c.l.b16 %v65
  %v406 = vunpack.c.h.b16 %v65
  %v407 = vunpack.c.l.b16 %v66
  %v408 = vunpack.c.h.b16 %v66
  %v409 = vunpack.c.l.b16 %v67
  %v410 = vunpack.c.h.b16 %v67
  %v411 = vunpack.c.l.b16 %v68
  %v412 = vunpack.c.h.b16 %v68
  %v413 = vunpack.c.l.b16 %v69
  %v414 = vunpack.c.h.b16 %v69
  %v415 = vunpack.c.l.b16 %v70
  %v416 = vunpack.c.h.b16 %v70
  %v417 = vunpack.c.l.b16 %v71
  %v418 = vunpack.c.h.b16 %v71
  %v419 = vunpack.c.l.b16 %v72
  %v420 = vunpack.c.h.b16 %v72
  %v421 = vunpack.c.l.b16 %v73
  %v422 = vunpack.c.h.b16 %v73
  %v423 = vunpack.c.l.b16 %v74
  %v424 = vunpack.c.h.b16 %v74
  %v425 = vunpack.c.l.b16 %v75
  %v426 = vunpack.c.h.b16 %v75
  %v427 = vunpack.c.l.b16 %v76
  %v428 = vunpack.c.h.b16 %v76
  %v429 = vunpack.c.l.b16 %v77
  %v430 = vunpack.c.h.b16 %v77
  %v431 = vunpack.c.l.b16 %v78
  %v432 = vunpack.c.h.b16 %v78
  %v433 = vunpack.c.l.b16 %v79
  %v434 = vunpack.c.h.b16 %v79
  %v435 = vunpack.c.l.b16 %v80
  %v436 = vunpack.c.h.b16 %v80
  %v437 = vunpack.c.l.b16 %v81
  %v438 = vunpack.c.h.b16 %v81
  %v439 = vunpack.c.l.b16 %v82
  %v440 = vunpack.c.h.b16 %v82
  %v441 = vunpack.c.l.b16 %v83
  %v442 = vunpack.c.h.b16 %v83
  %v443 = vunpack.c.l.b16 %v84
  %v444 = vunpack.c.h.b16 %v84
  %v445 = vunpack.c.l.b16 %v85
  %v446 = vunpack.c.h.b16 %v85
  %v447 = vunpack.c.l.b16 %v86
  %v448 = vunpack.c.h.b16 %v86
  %v449 = vunpack.c.l.b16 %v87
  %v450 = vunpack.c.h.b16 %v87
  %v451 = vunpack.c.l.b16 %v88
  %v452 = vunpack.c.h.b16 %v88
  %v453 = vunpack.c.l.b16 %v89
  %v454 = vunpack.c.h.b16 %v89
  %v455 = vunpack.c.l.b16 %v90
  %v456 = vunpack.c.h.b16 %v90
  %v457 = vunpack.c.l.b16 %v91
  %v458 = vunpack.c.h.b16 %v91
  %v459 = vunpack.c.l.b16 %v92
  %v460 = vunpack.c.h.b16 %v92
  %v461 = vunpack.c.l.b16 %v93
  %v462 = vunpack.c.h.b16 %v93
  %v463 = vunpack.c.l.b16 %v94
  %v464 = vunpack.c.h.b16 %v94
  %v465 = vunpack.c.l.b16 %v95
  %v466 = vunpack.c.h.b16 %v95
  %v467 = vunpack.c.l.b16 %v96
  %v468 = vunpack.c.h.b16 %v96
  %v469 = vunpack.c.l.b16 %v97
  %v470 = vunpack.c.h.b16 %v97
  %v471 = vunpack.c.l.b16 %v98
  %v472 = vunpack.c.h.b16 %v98
  %v473 = vunpack.c.l.b16 %v99
  %v474 = vunpack.c.h.b16 %v99
  %v475 = vunpack.c.l.b16 %v100
  %v476 = vunpack.c.h.b16 %v100
  %v477 = vunpack.c.l.b16 %v101
  %v478 = vunpack.c.h.b16 %v101
  %v479 = vunpack.c.l.b16 %v102
  %v480 = vunpack.c.h.b16 %v102
  %v481 = vunpack.c.l.b16 %v103
  %v482 = vunpack.c.h.b16 %v103
  %v483 = vunpack.c.l.b16 %v104
  %v484 = vunpack.c.h.b16 %v104
  %v485 = vunpack.c.l.b16 %v105
  %v486 = vunpack.c.h.b16 %v105
  %v487 = vunpack.c.l.b16 %v106
  %v488 = vunpack.c.h.b16 %v106
  %v489 = vunpack.c.l.b16 %v107
  %v490 = vunpack.c.h.b16 %v107
  %v491 = vunpack.c.l.b16 %v108
  %v492 = vunpack.c.h.b16 %v108
  %v493 = vpack.c.b16 %v307, %v301
  %v494 = vpack.c.b16 %v308, %v302
  %v495 = vpack.c.b16 %v309, %v303
  %v496 = vpack.c.b16 %v310, %v304
  %v497 = vpack.c.b16 %v311, %v305
  %v498 = vpack.c.b16 %v312, %v306
  %v499 = vpack.c.b16 %v319, %v313
  %v500 = vpack.c.b16 %v320, %v314
  %v501 = vpack.c.b16 %v321, %v315
  %v502 = vpack.c.b16 %v322, %v316
  %v503 = vpack.c.b16 %v323, %v317
  %v504 = vpack.c.b16 %v324, %v318
  %v505 = vpack.c.b16 %v331, %v325
  %v506 = vpack.c.b16 %v332, %v326
  %v507 = vpack.c.b16 %v333, %v327
  %v508 = vpack.c.b16 %v334, %v328
  %v509 = vpack.c.b16 %v335, %v329
  %v510 = vpack.c.b16 %v336, %v330
  %v511 = vpack.c.b16 %v343, %v337
  %v512 = vpack.c.b16 %v344, %v338
  %v513 = vpack.c.b16 %v345, %v339
  %v514 = vpack.c.b16 %v346, %v340
  %v515 = vpack.c.b16 %v347, %v341
  %v516 = vpack.c.b16 %v348, %v342
  %v517 = vpack.c.b16 %v355, %v349
  %v518 = vpack.c.b16 %v356, %v350
  %v519 = vpack.c.b16 %v357, %v351
  %v520 = vpack.c.b16 %v358, %v352
  %v521 = vpack.c.b16 %v359, %v353
  %v522 = vpack.c.b16 %v360, %v354
  %v523 = vpack.c.b16 %v367, %v361
  %v524 = vpack.c.b16 %v368, %v362
  %v525 = vpack.c.b16 %v369, %v363
  %v526 = vpack.c.b16 %v370, %v364
  %v527 = vpack.c.b16 %v371, %v365
  %v528 = vpack.c.b16 %v372, %v366
  %v529 = vpack.c.b16 %v379, %v373
  %v530 = vpack.c.b16 %v380, %v374
  %v531 = vpack.c.b16 %v381, %v375
  %v532 = vpack.c.b16 %v382, %v376
  %v533 = vpack.c.b16 %v383, %v377
  %v534 = vpack.c.b16 %v384, %v378
  %v535 = vpack.c.b16 %v391, %v385
  %v536 = vpack.c.b16 %v392, %v386
  %v537 = vpack.c.b16 %v393, %v387
  %v538 = vpack.c.b16 %v394, %v388
  %v539 = vpack.c.b16 %v395, %v389
  %v540 = vpack.c.b16 %v396, %v390
  %v541 = vpack.c.b16 %v403, %v397
  %v542 = vpack.c.b16 %v404, %v398
  %v543 = vpack.c.b16 %v405, %v399
  %v544 = vpack.c.b16 %v406, %v400
  %v545 = vpack.c.b16 %v407, %v401
  %v546 = vpack.c.b16 %v408, %v402
  %v547 = vpack.c.b16 %v415, %v409
  %v548 = vpack.c.b16 %v416, %v410
  %v549 = vpack.c.b16 %v417, %v411
  %v550 = vpack.c.b16 %v418, %v412
  %v551 = vpack.c.b16 %v419, %v413
  %v552 = vpack.c.b16 %v420, %v414
  %v553 = vpack.c.b16 %v427, %v421
  %v554 = vpack.c.b16 %v428, %v422
  %v555 = vpack.c.b16 %v429, %v423
  %v556 = vpack.c.b16 %v430, %v424
  %v557 = vpack.c.b16 %v431, %v425
  %v558 = vpack.c.b16 %v432, %v426
  %v559 = vpack.c.b16 %v439, %v433
  %v560 = vpack.c.b16 %v440, %v434
  %v561 = vpack.c.b16 %v441, %v435
  %v562 = vpack.c.b16 %v442, %v436
  %v563 = vpack.c.b16 %v443, %v437
  %v564 = vpack.c.b16 %v444, %v438
  %v565 = vpack.c.b16 %v451, %v445
  %v566 = vpack.c.b16 %v452, %v446
  %v567 = vpack.c.b16 %v453, %v447
  %v568 = vpack.c.b16 %v454, %v448
  %v569 = vpack.c.b16 %v455, %v449
  %v570 = vpack.c.b16 %v456, %v450
  %v571 = vpack.c.b16 %v463, %v457
  %v572 = vpack.c.b16 %v464, %v458
  %v573 = vpack.c.b16 %v465, %v459
  %v574 = vpack.c.b16 %v466, %v460
  %v575 = vpack.c.b16 %v467, %v461
  %v576 = vpack.c.b16 %v468, %v462
  %v577 = vpack.c.b16 %v475, %v469
  %v578 = vpack.c.b16 %v476, %v470
  %v579 = vpack.c.b16 %v477, %v471
  %v580 = vpack.c.b16 %v478, %v472
  %v581 = vpack.c.b16 %v479, %v473
  %v582 = vpack.c.b16 %v480, %v474
  %v583 = vpack.c.b16 %v487, %v481
  %v584 = vpack.c.b16 %v488, %v482
  %v585 = vpack.c.b16 %v489, %v483
  %v586 = vpack.c.b16 %v490, %v484
  %v587 = vpack.c.b16 %v491, %v485
  %v588 = vpack.c.b16 %v492, %v486
  %v781 = vunpack.c.l.b16 %v109
  %v782 = vunpack.c.h.b16 %v109
  %v783 = vunpack.c.l.b16 %v110
  %v784 = vunpack.c.h.b16 %v110
  %v785 = vunpack.c.l.b16 %v111
  %v786 = vunpack.c.h.b16 %v111
  %v787 = vunpack.c.l.b16 %v112
  %v788 = vunpack.c.h.b16 %v112
  %v789 = vunpack.c.l.b16 %v113
  %v790 = vunpack.c.h.b16 %v113
  %v791 = vunpack.c.l.b16 %v114
  %v792 = vunpack.c.h.b16 %v114
  %v793 = vunpack.c.l.b16 %v115
  %v794 = vunpack.c.h.b16 %v115
  %v795 = vunpack.c.l.b16 %v116
  %v796 = vunpack.c.h.b16 %v116
  %v797 = vunpack.c.l.b16 %v117
  %v798 = vunpack.c.h.b16 %v117
  %v799 = vunpack.c.l.b16 %v118
  %v800 = vunpack.c.h.b16 %v118
  %v801 = vunpack.c.l.b16 %v119
  %v802 = vunpack.c.h.b16 %v119
  %v803 = vunpack.c.l.b16 %v120
  %v804 = vunpack.c.h.b16 %v120
  %v805 = vunpack.c.l.b16 %v121
  %v806 = vunpack.c.h.b16 %v121
  %v807 = vunpack.c.l.b16 %v122
  %v808 = vunpack.c.h.b16 %v122
  %v809 = vunpack.c.l.b16 %v123
  %v810 = vunpack.c.h.b16 %v123
  %v811 = vunpack.c.l.b16 %v124
  %v812 = vunpack.c.h.b16 %v124
  %v813 = vunpack.c.l.b16 %v125
  %v814 = vunpack.c.h.b16 %v125
  %v815 = vunpack.c.l.b16 %v126
  %v816 = vunpack.c.h.b16 %v126
  %v817 = vunpack.c.l.b16 %v127
  %v818 = vunpack.c.h.b16 %v127
  %v819 = vunpack.c.l.b16 %v128
  %v820 = vunpack.c.h.b16 %v128
  %v821 = vunpack.c.l.b16 %v129
  %v822 = vunpack.c.h.b16 %v129
  %v823 = vunpack.c.l.b16 %v130
  %v824 = vunpack.c.h.b16 %v130
  %v825 = vunpack.c.l.b16 %v131
  %v826 = vunpack.c.h.b16 %v131
  %v827 = vunpack.c.l.b16 %v132
  %v828 = vunpack.c.h.b16 %v132
  %v829 = vunpack.c.l.b16 %v133
  %v830 = vunpack.c.h.b16 %v133
  %v831 = vunpack.c.l.b16 %v134
  %v832 = vunpack.c.h.b16 %v134
  %v833 = vunpack.c.l.b16 %v135
  %v834 = vunpack.c.h.b16 %v135
  %v835 = vunpack.c.l.b16 %v136
  %v836 = vunpack.c.h.b16 %v136
  %v837 = vunpack.c.l.b16 %v137
  %v838 = vunpack.c.h.b16 %v137
  %v839 = vunpack.c.l.b16 %v138
  %v840 = vunpack.c.h.b16 %v138
  %v841 = vunpack.c.l.b16 %v139
  %v842 = vunpack.c.h.b16 %v139
  %v843 = vunpack.c.l.b16 %v140
  %v844 = vunpack.c.h.b16 %v140
  %v845 = vunpack.c.l.b16 %v141
  %v846 = vunpack.c.h.b16 %v141
  %v847 = vunpack.c.l.b16 %v142
  %v848 = vunpack.c.h.b16 %v142
  %v849 = vunpack.c.l.b16 %v143
  %v850 = vunpack.c.h.b16 %v143
  %v851 = vunpack.c.l.b16 %v144
  %v852 = vunpack.c.h.b16 %v144
  %v853 = vunpack.c.l.b16 %v145
  %v854 = vunpack.c.h.b16 %v145
  %v855 = vunpack.c.l.b16 %v146
  %v856 = vunpack.c.h.b16 %v146
  %v857 = vunpack.c.l.b16 %v147
  %v858 = vunpack.c.h.b16 %v147
  %v859 = vunpack.c.l.b16 %v148
  %v860 = vunpack.c.h.b16 %v148
  %v861 = vunpack.c.l.b16 %v149
  %v862 = vunpack.c.h.b16 %v149
  %v863 = vunpack.c.l.b16 %v150
  %v864 = vunpack.c.h.b16 %v150
  %v865 = vunpack.c.l.b16 %v151
  %v866 = vunpack.c.h.b16 %v151
  %v867 = vunpack.c.l.b16 %v152
  %v868 = vunpack.c.h.b16 %v152
  %v869 = vunpack.c.l.b16 %v153
  %v870 = vunpack.c.h.b16 %v153
  %v871 = vunpack.c.l.b16 %v154
  %v872 = vunpack.c.h.b16 %v154
  %v873 = vunpack.c.l.b16 %v155
  %v874 = vunpack.c.h.b16 %v155
  %v875 = vunpack.c.l.b16 %v156
  %v876 = vunpack.c.h.b16 %v156
  %v877 = vunpack.c.l.b16 %v157
  %v878 = vunpack.c.h.b16 %v157
  %v879 = vunpack.c.l.b16 %v158
  %v880 = vunpack.c.h.b16 %v158
  %v881 = vunpack.c.l.b16 %v159
  %v882 = vunpack.c.h.b16 %v159
  %v883 = vunpack.c.l.b16 %v160
  %v884 = vunpack.c.h.b16 %v160
  %v885 = vunpack.c.l.b16 %v161
  %v886 = vunpack.c.h.b16 %v161
  %v887 = vunpack.c.l.b16 %v162
  %v888 = vunpack.c.h.b16 %v162
  %v889 = vunpack.c.l.b16 %v163
  %v890 = vunpack.c.h.b16 %v163
  %v891 = vunpack.c.l.b16 %v164
  %v892 = vunpack.c.h.b16 %v164
  %v893 = vunpack.c.l.b16 %v165
  %v894 = vunpack.c.h.b16 %v165
  %v895 = vunpack.c.l.b16 %v166
  %v896 = vunpack.c.h.b16 %v166
  %v897 = vunpack.c.l.b16 %v167
  %v898 = vunpack.c.h.b16 %v167
  %v899 = vunpack.c.l.b16 %v168
  %v900 = vunpack.c.h.b16 %v168
  %v901 = vunpack.c.l.b16 %v169
  %v902 = vunpack.c.h.b16 %v169
  %v903 = vunpack.c.l.b16 %v170
  %v904 = vunpack.c.h.b16 %v170
  %v905 = vunpack.c.l.b16 %v171
  %v906 = vunpack.c.h.b16 %v171
  %v907 = vunpack.c.l.b16 %v172
  %v908 = vunpack.c.h.b16 %v172
  %v909 = vunpack.c.l.b16 %v173
  %v910 = vunpack.c.h.b16 %v173
  %v911 = vunpack.c.l.b16 %v174
  %v912 = vunpack.c.h.b16 %v174
  %v913 = vunpack.c.l.b16 %v175
  %v914 = vunpack.c.h.b16 %v175
  %v915 = vunpack.c.l.b16 %v176
  %v916 = vunpack.c.h.b16 %v176
  %v917 = vunpack.c.l.b16 %v177
  %v918 = vunpack.c.h.b16 %v177
  %v919 = vunpack.c.l.b16 %v178
  %v920 = vunpack.c.h.b16 %v178
  %v921 = vunpack.c.l.b16 %v179
  %v922 = vunpack.c.h.b16 %v179
  %v923 = vunpack.c.l.b16 %v180
  %v924 = vunpack.c.h.b16 %v180
  %v925 = vunpack.c.l.b16 %v181
  %v926 = vunpack.c.h.b16 %v181
  %v927 = vunpack.c.l.b16 %v182
  %v928 = vunpack.c.h.b16 %v182
  %v929 = vunpack.c.l.b16 %v183
  %v930 = vunpack.c.h.b16 %v183
  %v931 = vunpack.c.l.b16 %v184
  %v932 = vunpack.c.h.b16 %v184
  %v933 = vunpack.c.l.b16 %v185
  %v934 = vunpack.c.h.b16 %v185
  %v935 = vunpack.c.l.b16 %v186
  %v936 = vunpack.c.h.b16 %v186
  %v937 = vunpack.c.l.b16 %v187
  %v938 = vunpack.c.h.b16 %v187
  %v939 = vunpack.c.l.b16 %v188
  %v940 = vunpack.c.h.b16 %v188
  %v941 = vunpack.c.l.b16 %v189
  %v942 = vunpack.c.h.b16 %v189
  %v943 = vunpack.c.l.b16 %v190
  %v944 = vunpack.c.h.b16 %v190
  %v945 = vunpack.c.l.b16 %v191
  %v946 = vunpack.c.h.b16 %v191
  %v947 = vunpack.c.l.b16 %v192
  %v948 = vunpack.c.h.b16 %v192
  %v949 = vunpack.c.l.b16 %v193
  %v950 = vunpack.c.h.b16 %v193
  %v951 = vunpack.c.l.b16 %v194
  %v952 = vunpack.c.h.b16 %v194
  %v953 = vunpack.c.l.b16 %v195
  %v954 = vunpack.c.h.b16 %v195
  %v955 = vunpack.c.l.b16 %v196
  %v956 = vunpack.c.h.b16 %v196
  %v957 = vunpack.c.l.b16 %v197
  %v958 = vunpack.c.h.b16 %v197
  %v959 = vunpack.c.l.b16 %v198
  %v960 = vunpack.c.h.b16 %v198
  %v961 = vunpack.c.l.b16 %v199
  %v962 = vunpack.c.h.b16 %v199
  %v963 = vunpack.c.l.b16 %v200
  %v964 = vunpack.c.h.b16 %v200
  %v965 = vunpack.c.l.b16 %v201
  %v966 = vunpack.c.h.b16 %v201
  %v967 = vunpack.c.l.b16 %v202
  %v968 = vunpack.c.h.b16 %v202
  %v969 = vunpack.c.l.b16 %v203
  %v970 = vunpack.c.h.b16 %v203
  %v971 = vunpack.c.l.b16 %v204
  %v972 = vunpack.c.h.b16 %v204
  %v973 = vpack.c.b16 %v783, %v781
  %v974 = vpack.c.b16 %v784, %v782
  %v975 = vpack.c.b16 %v787, %v785
  %v976 = vpack.c.b16 %v788, %v786
  %v977 = vpack.c.b16 %v791, %v789
  %v978 = vpack.c.b16 %v792, %v790
  %v979 = vpack.c.b16 %v795, %v793
  %v980 = vpack.c.b16 %v796, %v794
  %v981 = vpack.c.b16 %v799, %v797
  %v982 = vpack.c.b16 %v800, %v798
  %v983 = vpack.c.b16 %v803, %v801
  %v984 = vpack.c.b16 %v804, %v802
  %v985 = vpack.c.b16 %v807, %v805
  %v986 = vpack.c.b16 %v808, %v806
  %v987 = vpack.c.b16 %v811, %v809
  %v988 = vpack.c.b16 %v812, %v810
  %v989 = vpack.c.b16 %v815, %v813
  %v990 = vpack.c.b16 %v816, %v814
  %v991 = vpack.c.b16 %v819, %v817
  %v992 = vpack.c.b16 %v820, %v818
  %v993 = vpack.c.b16 %v823, %v821
  %v994 = vpack.c.b16 %v824, %v822
  %v995 = vpack.c.b16 %v827, %v825
  %v996 = vpack.c.b16 %v828, %v826
  %v997 = vpack.c.b16 %v831, %v829
  %v998 = vpack.c.b16 %v832, %v830
  %v999 = vpack.c.b16 %v835, %v833
  %v1000 = vpack.c.b16 %v836, %v834
  %v1001 = vpack.c.b16 %v839, %v837
  %v1002 = vpack.c.b16 %v840, %v838
  %v1003 = vpack.c.b16 %v843, %v841
  %v1004 = vpack.c.b16 %v844, %v842
  %v1005 = vpack.c.b16 %v847, %v845
  %v1006 = vpack.c.b16 %v848, %v846
  %v1007 = vpack.c.b16 %v851, %v849
  %v1008 = vpack.c.b16 %v852, %v850
  %v1009 = vpack.c.b16 %v855, %v853
  %v1010 = vpack.c.b16 %v856, %v854
  %v1011 = vpack.c.b16 %v859, %v857
  %v1012 = vpack.c.b16 %v860, %v858
  %v1013 = vpack.c.b16 %v863, %v861
  %v1014 = vpack.c.b16 %v864, %v862
  %v1015 = vpack.c.b16 %v867, %v865
  %v1016 = vpack.c.b16 %v868, %v866
  %v1017 = vpack.c.b16 %v871, %v869
  %v1018 = vpack.c.b16 %v872, %v870
  %v1019 = vpack.c.b16 %v875, %v873
  %v1020 = vpack.c.b16 %v876, %v874
  %v1021 = vpack.c.b16 %v879, %v877
  %v1022 = vpack.c.b16 %v880, %v878
  %v1023 = vpack.c.b16 %v883, %v881
  %v1024 = vpack.c.b16 %v884, %v882
  %v1025 = vpack.c.b16 %v887, %v885
  %v1026 = vpack.c.b16 %v888, %v886
  %v1027 = vpack.c.b16 %v891, %v889
  %v1028 = vpack.c.b16 %v892, %v890
  %v1029 = vpack.c.b16 %v895, %v893
  %v1030 = vpack.c.b16 %v896, %v894
  %v1031 = vpack.c.b16 %v899, %v897
  %v1032 = vpack.c.b16 %v900, %v898
  %v1033 = vpack.c.b16 %v903, %v901
  %v1034 = vpack.c.b16 %v904, %v902
  %v1035 = vpack.c.b16 %v907, %v905
  %v1036 = vpack.c.b16 %v908, %v906
  %v1037 = vpack.c.b16 %v911, %v909
  %v1038 = vpack.c.b16 %v912, %v910
  %v1039 = vpack.c.b16 %v915, %v913
  %v1040 = vpack.c.b16 %v916, %v914
  %v1041 = vpack.c.b16 %v919, %v917
  %v1042 = vpack.c.b16 %v920, %v918
  %v1043 = vpack.c.b16 %v923, %v921
  %v1044 = vpack.c.b16 %v924, %v922
  %v1045 = vpack.c.b16 %v927, %v925
  %v1046 = vpack.c.b16 %v928, %v926
  %v1047 = vpack.c.b16 %v931, %v929
  %v1048 = vpack.c.b16 %v932, %v930
  %v1049 = vpack.c.b16 %v935, %v933
  %v1050 = vpack.c.b16 %v936, %v934
  %v1051 = vpack.c.b16 %v939, %v937
  %v1052 = vpack.c.b16 %v940, %v938
  %v1053 = vpack.c.b16 %v943, %v941
  %v1054 = vpack.c.b16 %v944, %v942
  %v1055 = vpack.c.b16 %v947, %v945
  %v1056 = vpack.c.b16 %v948, %v946
  %v1057 = vpack.c.b16 %v951, %v949
  %v1058 = vpack.c.b16 %v952, %v950
  %v1059 = vpack.c.b16 %v955, %v953
  %v1060 = vpack.c.b16 %v956, %v954
  %v1061 = vpack.c.b16 %v959, %v957
  %v1062 = vpack.c.b16 %v960, %v958
  %v1063 = vpack.c.b16 %v963, %v961
  %v1064 = vpack.c.b16 %v964, %v962
  %v1065 = vpack.c.b16 %v967, %v965
  %v1066 = vpack.c.b16 %v968, %v966
  %v1067 = vpack.c.b16 %v971, %v969
  %v1068 = vpack.c.b16 %v972, %v970
  %1165 = vmatpush.bf16.msra.mxu0 %v987
  %1166 = vmatpush.bf16.msra.mxu0 %v985
  %1167 = vmatpush.bf16.msra.mxu0 %v983
  %1168 = vmatpush.bf16.msra.mxu0 %v981
  %1169 = vmatpush.bf16.msra.mxu0 %v979
  %1170 = vmatpush.bf16.msra.mxu0 %v977
  %1171 = vmatpush.bf16.msra.mxu0 %v975
  %1172 = vmatpush.bf16.msra.mxu0 %v973
  %1173 = vmatmul.bf16.gmra.mxu0 %v493
  %v1174 = vpop.f32.mrf.mxu0
  %v1175 = vadd.f32 0.0, %v1174
  %v1176 = vpop.f32.mrf.mxu0
  %v1177 = vadd.f32 0.0, %v1176
  %1178 = vmatmul.bf16.gmra.mxu0 %v499
  %v1179 = vpop.f32.mrf.mxu0
  %v1180 = vadd.f32 0.0, %v1179
  %v1181 = vpop.f32.mrf.mxu0
  %v1182 = vadd.f32 0.0, %v1181
  %1183 = vmatmul.bf16.gmra.mxu0 %v505
  %v1184 = vpop.f32.mrf.mxu0
  %v1185 = vadd.f32 0.0, %v1184
  %v1186 = vpop.f32.mrf.mxu0
  %v1187 = vadd.f32 0.0, %v1186
  %1188 = vmatmul.bf16.gmra.mxu0 %v511
  %v1189 = vpop.f32.mrf.mxu0
  %v1190 = vadd.f32 0.0, %v1189
  %v1191 = vpop.f32.mrf.mxu0
  %v1192 = vadd.f32 0.0, %v1191
  %1193 = vmatmul.bf16.gmra.mxu0 %v517
  %v1194 = vpop.f32.mrf.mxu0
  %v1195 = vadd.f32 0.0, %v1194
  %v1196 = vpop.f32.mrf.mxu0
  %v1197 = vadd.f32 0.0, %v1196
  %1198 = vmatmul.bf16.gmra.mxu0 %v523
  %v1199 = vpop.f32.mrf.mxu0
  %v1200 = vadd.f32 0.0, %v1199
  %v1201 = vpop.f32.mrf.mxu0
  %v1202 = vadd.f32 0.0, %v1201
  %1203 = vmatmul.bf16.gmra.mxu0 %v529
  %v1204 = vpop.f32.mrf.mxu0
  %v1205 = vadd.f32 0.0, %v1204
  %v1206 = vpop.f32.mrf.mxu0
  %v1207 = vadd.f32 0.0, %v1206
  %1208 = vmatmul.bf16.gmra.mxu0 %v535
  %v1209 = vpop.f32.mrf.mxu0
  %v1210 = vadd.f32 0.0, %v1209
  %v1211 = vpop.f32.mrf.mxu0
  %v1212 = vadd.f32 0.0, %v1211
  %1213 = vmatmul.bf16.gmra.mxu0 %v541
  %v1214 = vpop.f32.mrf.mxu0
  %v1215 = vadd.f32 0.0, %v1214
  %v1216 = vpop.f32.mrf.mxu0
  %v1217 = vadd.f32 0.0, %v1216
  %1218 = vmatmul.bf16.gmra.mxu0 %v547
  %v1219 = vpop.f32.mrf.mxu0
  %v1220 = vadd.f32 0.0, %v1219
  %v1221 = vpop.f32.mrf.mxu0
  %v1222 = vadd.f32 0.0, %v1221
  %1223 = vmatmul.bf16.gmra.mxu0 %v553
  %v1224 = vpop.f32.mrf.mxu0
  %v1225 = vadd.f32 0.0, %v1224
  %v1226 = vpop.f32.mrf.mxu0
  %v1227 = vadd.f32 0.0, %v1226
  %1228 = vmatmul.bf16.gmra.mxu0 %v559
  %v1229 = vpop.f32.mrf.mxu0
  %v1230 = vadd.f32 0.0, %v1229
  %v1231 = vpop.f32.mrf.mxu0
  %v1232 = vadd.f32 0.0, %v1231
  %1233 = vmatmul.bf16.gmra.mxu0 %v565
  %v1234 = vpop.f32.mrf.mxu0
  %v1235 = vadd.f32 0.0, %v1234
  %v1236 = vpop.f32.mrf.mxu0
  %v1237 = vadd.f32 0.0, %v1236
  %1238 = vmatmul.bf16.gmra.mxu0 %v571
  %v1239 = vpop.f32.mrf.mxu0
  %v1240 = vadd.f32 0.0, %v1239
  %v1241 = vpop.f32.mrf.mxu0
  %v1242 = vadd.f32 0.0, %v1241
  %1243 = vmatmul.bf16.gmra.mxu0 %v577
  %v1244 = vpop.f32.mrf.mxu0
  %v1245 = vadd.f32 0.0, %v1244
  %v1246 = vpop.f32.mrf.mxu0
  %v1247 = vadd.f32 0.0, %v1246
  %1248 = vmatmul.bf16.gmra.mxu0 %v583
  %v1249 = vpop.f32.mrf.mxu0
  %v1250 = vadd.f32 0.0, %v1249
  %v1251 = vpop.f32.mrf.mxu0
  %v1252 = vadd.f32 0.0, %v1251
  %1253 = vdwg.mxu0
  %1254 = vmatpush.bf16.msra.mxu0 %v1003
  %1255 = vmatpush.bf16.msra.mxu0 %v1001
  %1256 = vmatpush.bf16.msra.mxu0 %v999
  %1257 = vmatpush.bf16.msra.mxu0 %v997
  %1258 = vmatpush.bf16.msra.mxu0 %v995
  %1259 = vmatpush.bf16.msra.mxu0 %v993
  %1260 = vmatpush.bf16.msra.mxu0 %v991
  %1261 = vmatpush.bf16.msra.mxu0 %v989
  %1262 = vmatmul.bf16.gmra.mxu0 %v494
  %v1263 = vpop.f32.mrf.mxu0
  %v1264 = vadd.f32 %v1175, %v1263
  %v1265 = vpop.f32.mrf.mxu0
  %v1266 = vadd.f32 %v1177, %v1265
  %1267 = vmatmul.bf16.gmra.mxu0 %v500
  %v1268 = vpop.f32.mrf.mxu0
  %v1269 = vadd.f32 %v1180, %v1268
  %v1270 = vpop.f32.mrf.mxu0
  %v1271 = vadd.f32 %v1182, %v1270
  %1272 = vmatmul.bf16.gmra.mxu0 %v506
  %v1273 = vpop.f32.mrf.mxu0
  %v1274 = vadd.f32 %v1185, %v1273
  %v1275 = vpop.f32.mrf.mxu0
  %v1276 = vadd.f32 %v1187, %v1275
  %1277 = vmatmul.bf16.gmra.mxu0 %v512
  %v1278 = vpop.f32.mrf.mxu0
  %v1279 = vadd.f32 %v1190, %v1278
  %v1280 = vpop.f32.mrf.mxu0
  %v1281 = vadd.f32 %v1192, %v1280
  %1282 = vmatmul.bf16.gmra.mxu0 %v518
  %v1283 = vpop.f32.mrf.mxu0
  %v1284 = vadd.f32 %v1195, %v1283
  %v1285 = vpop.f32.mrf.mxu0
  %v1286 = vadd.f32 %v1197, %v1285
  %1287 = vmatmul.bf16.gmra.mxu0 %v524
  %v1288 = vpop.f32.mrf.mxu0
  %v1289 = vadd.f32 %v1200, %v1288
  %v1290 = vpop.f32.mrf.mxu0
  %v1291 = vadd.f32 %v1202, %v1290
  %1292 = vmatmul.bf16.gmra.mxu0 %v530
  %v1293 = vpop.f32.mrf.mxu0
  %v1294 = vadd.f32 %v1205, %v1293
  %v1295 = vpop.f32.mrf.mxu0
  %v1296 = vadd.f32 %v1207, %v1295
  %1297 = vmatmul.bf16.gmra.mxu0 %v536
  %v1298 = vpop.f32.mrf.mxu0
  %v1299 = vadd.f32 %v1210, %v1298
  %v1300 = vpop.f32.mrf.mxu0
  %v1301 = vadd.f32 %v1212, %v1300
  %1302 = vmatmul.bf16.gmra.mxu0 %v542
  %v1303 = vpop.f32.mrf.mxu0
  %v1304 = vadd.f32 %v1215, %v1303
  %v1305 = vpop.f32.mrf.mxu0
  %v1306 = vadd.f32 %v1217, %v1305
  %1307 = vmatmul.bf16.gmra.mxu0 %v548
  %v1308 = vpop.f32.mrf.mxu0
  %v1309 = vadd.f32 %v1220, %v1308
  %v1310 = vpop.f32.mrf.mxu0
  %v1311 = vadd.f32 %v1222, %v1310
  %1312 = vmatmul.bf16.gmra.mxu0 %v554
  %v1313 = vpop.f32.mrf.mxu0
  %v1314 = vadd.f32 %v1225, %v1313
  %v1315 = vpop.f32.mrf.mxu0
  %v1316 = vadd.f32 %v1227, %v1315
  %1317 = vmatmul.bf16.gmra.mxu0 %v560
  %v1318 = vpop.f32.mrf.mxu0
  %v1319 = vadd.f32 %v1230, %v1318
  %v1320 = vpop.f32.mrf.mxu0
  %v1321 = vadd.f32 %v1232, %v1320
  %1322 = vmatmul.bf16.gmra.mxu0 %v566
  %v1323 = vpop.f32.mrf.mxu0
  %v1324 = vadd.f32 %v1235, %v1323
  %v1325 = vpop.f32.mrf.mxu0
  %v1326 = vadd.f32 %v1237, %v1325
  %1327 = vmatmul.bf16.gmra.mxu0 %v572
  %v1328 = vpop.f32.mrf.mxu0
  %v1329 = vadd.f32 %v1240, %v1328
  %v1330 = vpop.f32.mrf.mxu0
  %v1331 = vadd.f32 %v1242, %v1330
  %1332 = vmatmul.bf16.gmra.mxu0 %v578
  %v1333 = vpop.f32.mrf.mxu0
  %v1334 = vadd.f32 %v1245, %v1333
  %v1335 = vpop.f32.mrf.mxu0
  %v1336 = vadd.f32 %v1247, %v1335
  %1337 = vmatmul.bf16.gmra.mxu0 %v584
  %v1338 = vpop.f32.mrf.mxu0
  %v1339 = vadd.f32 %v1250, %v1338
  %v1340 = vpop.f32.mrf.mxu0
  %v1341 = vadd.f32 %v1252, %v1340
  %1342 = vdwg.mxu0
  %1343 = vmatpush.bf16.msra.mxu0 %v1019
  %1344 = vmatpush.bf16.msra.mxu0 %v1017
  %1345 = vmatpush.bf16.msra.mxu0 %v1015
  %1346 = vmatpush.bf16.msra.mxu0 %v1013
  %1347 = vmatpush.bf16.msra.mxu0 %v1011
  %1348 = vmatpush.bf16.msra.mxu0 %v1009
  %1349 = vmatpush.bf16.msra.mxu0 %v1007
  %1350 = vmatpush.bf16.msra.mxu0 %v1005
  %1351 = vmatmul.bf16.gmra.mxu0 %v495
  %v1352 = vpop.f32.mrf.mxu0
  %v1353 = vadd.f32 %v1264, %v1352
  %v1354 = vpop.f32.mrf.mxu0
  %v1355 = vadd.f32 %v1266, %v1354
  %1356 = vmatmul.bf16.gmra.mxu0 %v501
  %v1357 = vpop.f32.mrf.mxu0
  %v1358 = vadd.f32 %v1269, %v1357
  %v1359 = vpop.f32.mrf.mxu0
  %v1360 = vadd.f32 %v1271, %v1359
  %1361 = vmatmul.bf16.gmra.mxu0 %v507
  %v1362 = vpop.f32.mrf.mxu0
  %v1363 = vadd.f32 %v1274, %v1362
  %v1364 = vpop.f32.mrf.mxu0
  %v1365 = vadd.f32 %v1276, %v1364
  %1366 = vmatmul.bf16.gmra.mxu0 %v513
  %v1367 = vpop.f32.mrf.mxu0
  %v1368 = vadd.f32 %v1279, %v1367
  %v1369 = vpop.f32.mrf.mxu0
  %v1370 = vadd.f32 %v1281, %v1369
  %1371 = vmatmul.bf16.gmra.mxu0 %v519
  %v1372 = vpop.f32.mrf.mxu0
  %v1373 = vadd.f32 %v1284, %v1372
  %v1374 = vpop.f32.mrf.mxu0
  %v1375 = vadd.f32 %v1286, %v1374
  %1376 = vmatmul.bf16.gmra.mxu0 %v525
  %v1377 = vpop.f32.mrf.mxu0
  %v1378 = vadd.f32 %v1289, %v1377
  %v1379 = vpop.f32.mrf.mxu0
  %v1380 = vadd.f32 %v1291, %v1379
  %1381 = vmatmul.bf16.gmra.mxu0 %v531
  %v1382 = vpop.f32.mrf.mxu0
  %v1383 = vadd.f32 %v1294, %v1382
  %v1384 = vpop.f32.mrf.mxu0
  %v1385 = vadd.f32 %v1296, %v1384
  %1386 = vmatmul.bf16.gmra.mxu0 %v537
  %v1387 = vpop.f32.mrf.mxu0
  %v1388 = vadd.f32 %v1299, %v1387
  %v1389 = vpop.f32.mrf.mxu0
  %v1390 = vadd.f32 %v1301, %v1389
  %1391 = vmatmul.bf16.gmra.mxu0 %v543
  %v1392 = vpop.f32.mrf.mxu0
  %v1393 = vadd.f32 %v1304, %v1392
  %v1394 = vpop.f32.mrf.mxu0
  %v1395 = vadd.f32 %v1306, %v1394
  %1396 = vmatmul.bf16.gmra.mxu0 %v549
  %v1397 = vpop.f32.mrf.mxu0
  %v1398 = vadd.f32 %v1309, %v1397
  %v1399 = vpop.f32.mrf.mxu0
  %v1400 = vadd.f32 %v1311, %v1399
  %1401 = vmatmul.bf16.gmra.mxu0 %v555
  %v1402 = vpop.f32.mrf.mxu0
  %v1403 = vadd.f32 %v1314, %v1402
  %v1404 = vpop.f32.mrf.mxu0
  %v1405 = vadd.f32 %v1316, %v1404
  %1406 = vmatmul.bf16.gmra.mxu0 %v561
  %v1407 = vpop.f32.mrf.mxu0
  %v1408 = vadd.f32 %v1319, %v1407
  %v1409 = vpop.f32.mrf.mxu0
  %v1410 = vadd.f32 %v1321, %v1409
  %1411 = vmatmul.bf16.gmra.mxu0 %v567
  %v1412 = vpop.f32.mrf.mxu0
  %v1413 = vadd.f32 %v1324, %v1412
  %v1414 = vpop.f32.mrf.mxu0
  %v1415 = vadd.f32 %v1326, %v1414
  %1416 = vmatmul.bf16.gmra.mxu0 %v573
  %v1417 = vpop.f32.mrf.mxu0
  %v1418 = vadd.f32 %v1329, %v1417
  %v1419 = vpop.f32.mrf.mxu0
  %v1420 = vadd.f32 %v1331, %v1419
  %1421 = vmatmul.bf16.gmra.mxu0 %v579
  %v1422 = vpop.f32.mrf.mxu0
  %v1423 = vadd.f32 %v1334, %v1422
  %v1424 = vpop.f32.mrf.mxu0
  %v1425 = vadd.f32 %v1336, %v1424
  %1426 = vmatmul.bf16.gmra.mxu0 %v585
  %v1427 = vpop.f32.mrf.mxu0
  %v1428 = vadd.f32 %v1339, %v1427
  %v1429 = vpop.f32.mrf.mxu0
  %v1430 = vadd.f32 %v1341, %v1429
  %1431 = vdwg.mxu0
  %1432 = vmatpush.bf16.msra.mxu0 %v1035
  %1433 = vmatpush.bf16.msra.mxu0 %v1033
  %1434 = vmatpush.bf16.msra.mxu0 %v1031
  %1435 = vmatpush.bf16.msra.mxu0 %v1029
  %1436 = vmatpush.bf16.msra.mxu0 %v1027
  %1437 = vmatpush.bf16.msra.mxu0 %v1025
  %1438 = vmatpush.bf16.msra.mxu0 %v1023
  %1439 = vmatpush.bf16.msra.mxu0 %v1021
  %1440 = vmatmul.bf16.gmra.mxu0 %v496
  %v1441 = vpop.f32.mrf.mxu0
  %v1442 = vadd.f32 %v1353, %v1441
  %v1443 = vpop.f32.mrf.mxu0
  %v1444 = vadd.f32 %v1355, %v1443
  %1445 = vmatmul.bf16.gmra.mxu0 %v502
  %v1446 = vpop.f32.mrf.mxu0
  %v1447 = vadd.f32 %v1358, %v1446
  %v1448 = vpop.f32.mrf.mxu0
  %v1449 = vadd.f32 %v1360, %v1448
  %1450 = vmatmul.bf16.gmra.mxu0 %v508
  %v1451 = vpop.f32.mrf.mxu0
  %v1452 = vadd.f32 %v1363, %v1451
  %v1453 = vpop.f32.mrf.mxu0
  %v1454 = vadd.f32 %v1365, %v1453
  %1455 = vmatmul.bf16.gmra.mxu0 %v514
  %v1456 = vpop.f32.mrf.mxu0
  %v1457 = vadd.f32 %v1368, %v1456
  %v1458 = vpop.f32.mrf.mxu0
  %v1459 = vadd.f32 %v1370, %v1458
  %1460 = vmatmul.bf16.gmra.mxu0 %v520
  %v1461 = vpop.f32.mrf.mxu0
  %v1462 = vadd.f32 %v1373, %v1461
  %v1463 = vpop.f32.mrf.mxu0
  %v1464 = vadd.f32 %v1375, %v1463
  %1465 = vmatmul.bf16.gmra.mxu0 %v526
  %v1466 = vpop.f32.mrf.mxu0
  %v1467 = vadd.f32 %v1378, %v1466
  %v1468 = vpop.f32.mrf.mxu0
  %v1469 = vadd.f32 %v1380, %v1468
  %1470 = vmatmul.bf16.gmra.mxu0 %v532
  %v1471 = vpop.f32.mrf.mxu0
  %v1472 = vadd.f32 %v1383, %v1471
  %v1473 = vpop.f32.mrf.mxu0
  %v1474 = vadd.f32 %v1385, %v1473
  %1475 = vmatmul.bf16.gmra.mxu0 %v538
  %v1476 = vpop.f32.mrf.mxu0
  %v1477 = vadd.f32 %v1388, %v1476
  %v1478 = vpop.f32.mrf.mxu0
  %v1479 = vadd.f32 %v1390, %v1478
  %1480 = vmatmul.bf16.gmra.mxu0 %v544
  %v1481 = vpop.f32.mrf.mxu0
  %v1482 = vadd.f32 %v1393, %v1481
  %v1483 = vpop.f32.mrf.mxu0
  %v1484 = vadd.f32 %v1395, %v1483
  %1485 = vmatmul.bf16.gmra.mxu0 %v550
  %v1486 = vpop.f32.mrf.mxu0
  %v1487 = vadd.f32 %v1398, %v1486
  %v1488 = vpop.f32.mrf.mxu0
  %v1489 = vadd.f32 %v1400, %v1488
  %1490 = vmatmul.bf16.gmra.mxu0 %v556
  %v1491 = vpop.f32.mrf.mxu0
  %v1492 = vadd.f32 %v1403, %v1491
  %v1493 = vpop.f32.mrf.mxu0
  %v1494 = vadd.f32 %v1405, %v1493
  %1495 = vmatmul.bf16.gmra.mxu0 %v562
  %v1496 = vpop.f32.mrf.mxu0
  %v1497 = vadd.f32 %v1408, %v1496
  %v1498 = vpop.f32.mrf.mxu0
  %v1499 = vadd.f32 %v1410, %v1498
  %1500 = vmatmul.bf16.gmra.mxu0 %v568
  %v1501 = vpop.f32.mrf.mxu0
  %v1502 = vadd.f32 %v1413, %v1501
  %v1503 = vpop.f32.mrf.mxu0
  %v1504 = vadd.f32 %v1415, %v1503
  %1505 = vmatmul.bf16.gmra.mxu0 %v574
  %v1506 = vpop.f32.mrf.mxu0
  %v1507 = vadd.f32 %v1418, %v1506
  %v1508 = vpop.f32.mrf.mxu0
  %v1509 = vadd.f32 %v1420, %v1508
  %1510 = vmatmul.bf16.gmra.mxu0 %v580
  %v1511 = vpop.f32.mrf.mxu0
  %v1512 = vadd.f32 %v1423, %v1511
  %v1513 = vpop.f32.mrf.mxu0
  %v1514 = vadd.f32 %v1425, %v1513
  %1515 = vmatmul.bf16.gmra.mxu0 %v586
  %v1516 = vpop.f32.mrf.mxu0
  %v1517 = vadd.f32 %v1428, %v1516
  %v1518 = vpop.f32.mrf.mxu0
  %v1519 = vadd.f32 %v1430, %v1518
  %1520 = vdwg.mxu0
  %1521 = vmatpush.bf16.msra.mxu0 %v1051
  %1522 = vmatpush.bf16.msra.mxu0 %v1049
  %1523 = vmatpush.bf16.msra.mxu0 %v1047
  %1524 = vmatpush.bf16.msra.mxu0 %v1045
  %1525 = vmatpush.bf16.msra.mxu0 %v1043
  %1526 = vmatpush.bf16.msra.mxu0 %v1041
  %1527 = vmatpush.bf16.msra.mxu0 %v1039
  %1528 = vmatpush.bf16.msra.mxu0 %v1037
  %1529 = vmatmul.bf16.gmra.mxu0 %v497
  %v1530 = vpop.f32.mrf.mxu0
  %v1531 = vadd.f32 %v1442, %v1530
  %v1532 = vpop.f32.mrf.mxu0
  %v1533 = vadd.f32 %v1444, %v1532
  %1534 = vmatmul.bf16.gmra.mxu0 %v503
  %v1535 = vpop.f32.mrf.mxu0
  %v1536 = vadd.f32 %v1447, %v1535
  %v1537 = vpop.f32.mrf.mxu0
  %v1538 = vadd.f32 %v1449, %v1537
  %1539 = vmatmul.bf16.gmra.mxu0 %v509
  %v1540 = vpop.f32.mrf.mxu0
  %v1541 = vadd.f32 %v1452, %v1540
  %v1542 = vpop.f32.mrf.mxu0
  %v1543 = vadd.f32 %v1454, %v1542
  %1544 = vmatmul.bf16.gmra.mxu0 %v515
  %v1545 = vpop.f32.mrf.mxu0
  %v1546 = vadd.f32 %v1457, %v1545
  %v1547 = vpop.f32.mrf.mxu0
  %v1548 = vadd.f32 %v1459, %v1547
  %1549 = vmatmul.bf16.gmra.mxu0 %v521
  %v1550 = vpop.f32.mrf.mxu0
  %v1551 = vadd.f32 %v1462, %v1550
  %v1552 = vpop.f32.mrf.mxu0
  %v1553 = vadd.f32 %v1464, %v1552
  %1554 = vmatmul.bf16.gmra.mxu0 %v527
  %v1555 = vpop.f32.mrf.mxu0
  %v1556 = vadd.f32 %v1467, %v1555
  %v1557 = vpop.f32.mrf.mxu0
  %v1558 = vadd.f32 %v1469, %v1557
  %1559 = vmatmul.bf16.gmra.mxu0 %v533
  %v1560 = vpop.f32.mrf.mxu0
  %v1561 = vadd.f32 %v1472, %v1560
  %v1562 = vpop.f32.mrf.mxu0
  %v1563 = vadd.f32 %v1474, %v1562
  %1564 = vmatmul.bf16.gmra.mxu0 %v539
  %v1565 = vpop.f32.mrf.mxu0
  %v1566 = vadd.f32 %v1477, %v1565
  %v1567 = vpop.f32.mrf.mxu0
  %v1568 = vadd.f32 %v1479, %v1567
  %1569 = vmatmul.bf16.gmra.mxu0 %v545
  %v1570 = vpop.f32.mrf.mxu0
  %v1571 = vadd.f32 %v1482, %v1570
  %v1572 = vpop.f32.mrf.mxu0
  %v1573 = vadd.f32 %v1484, %v1572
  %1574 = vmatmul.bf16.gmra.mxu0 %v551
  %v1575 = vpop.f32.mrf.mxu0
  %v1576 = vadd.f32 %v1487, %v1575
  %v1577 = vpop.f32.mrf.mxu0
  %v1578 = vadd.f32 %v1489, %v1577
  %1579 = vmatmul.bf16.gmra.mxu0 %v557
  %v1580 = vpop.f32.mrf.mxu0
  %v1581 = vadd.f32 %v1492, %v1580
  %v1582 = vpop.f32.mrf.mxu0
  %v1583 = vadd.f32 %v1494, %v1582
  %1584 = vmatmul.bf16.gmra.mxu0 %v563
  %v1585 = vpop.f32.mrf.mxu0
  %v1586 = vadd.f32 %v1497, %v1585
  %v1587 = vpop.f32.mrf.mxu0
  %v1588 = vadd.f32 %v1499, %v1587
  %1589 = vmatmul.bf16.gmra.mxu0 %v569
  %v1590 = vpop.f32.mrf.mxu0
  %v1591 = vadd.f32 %v1502, %v1590
  %v1592 = vpop.f32.mrf.mxu0
  %v1593 = vadd.f32 %v1504, %v1592
  %1594 = vmatmul.bf16.gmra.mxu0 %v575
  %v1595 = vpop.f32.mrf.mxu0
  %v1596 = vadd.f32 %v1507, %v1595
  %v1597 = vpop.f32.mrf.mxu0
  %v1598 = vadd.f32 %v1509, %v1597
  %1599 = vmatmul.bf16.gmra.mxu0 %v581
  %v1600 = vpop.f32.mrf.mxu0
  %v1601 = vadd.f32 %v1512, %v1600
  %v1602 = vpop.f32.mrf.mxu0
  %v1603 = vadd.f32 %v1514, %v1602
  %1604 = vmatmul.bf16.gmra.mxu0 %v587
  %v1605 = vpop.f32.mrf.mxu0
  %v1606 = vadd.f32 %v1517, %v1605
  %v1607 = vpop.f32.mrf.mxu0
  %v1608 = vadd.f32 %v1519, %v1607
  %1609 = vdwg.mxu0
  %1610 = vmatpush.bf16.msra.mxu0 %v1067
  %1611 = vmatpush.bf16.msra.mxu0 %v1065
  %1612 = vmatpush.bf16.msra.mxu0 %v1063
  %1613 = vmatpush.bf16.msra.mxu0 %v1061
  %1614 = vmatpush.bf16.msra.mxu0 %v1059
  %1615 = vmatpush.bf16.msra.mxu0 %v1057
  %1616 = vmatpush.bf16.msra.mxu0 %v1055
  %1617 = vmatpush.bf16.msra.mxu0 %v1053
  %1618 = vmatmul.bf16.gmra.mxu0 %v498
  %v1619 = vpop.f32.mrf.mxu0
  %v1620 = vadd.f32 %v1531, %v1619
  %v1621 = vpop.f32.mrf.mxu0
  %v1622 = vadd.f32 %v1533, %v1621
  %1623 = vmatmul.bf16.gmra.mxu0 %v504
  %v1624 = vpop.f32.mrf.mxu0
  %v1625 = vadd.f32 %v1536, %v1624
  %v1626 = vpop.f32.mrf.mxu0
  %v1627 = vadd.f32 %v1538, %v1626
  %1628 = vmatmul.bf16.gmra.mxu0 %v510
  %v1629 = vpop.f32.mrf.mxu0
  %v1630 = vadd.f32 %v1541, %v1629
  %v1631 = vpop.f32.mrf.mxu0
  %v1632 = vadd.f32 %v1543, %v1631
  %1633 = vmatmul.bf16.gmra.mxu0 %v516
  %v1634 = vpop.f32.mrf.mxu0
  %v1635 = vadd.f32 %v1546, %v1634
  %v1636 = vpop.f32.mrf.mxu0
  %v1637 = vadd.f32 %v1548, %v1636
  %1638 = vmatmul.bf16.gmra.mxu0 %v522
  %v1639 = vpop.f32.mrf.mxu0
  %v1640 = vadd.f32 %v1551, %v1639
  %v1641 = vpop.f32.mrf.mxu0
  %v1642 = vadd.f32 %v1553, %v1641
  %1643 = vmatmul.bf16.gmra.mxu0 %v528
  %v1644 = vpop.f32.mrf.mxu0
  %v1645 = vadd.f32 %v1556, %v1644
  %v1646 = vpop.f32.mrf.mxu0
  %v1647 = vadd.f32 %v1558, %v1646
  %1648 = vmatmul.bf16.gmra.mxu0 %v534
  %v1649 = vpop.f32.mrf.mxu0
  %v1650 = vadd.f32 %v1561, %v1649
  %v1651 = vpop.f32.mrf.mxu0
  %v1652 = vadd.f32 %v1563, %v1651
  %1653 = vmatmul.bf16.gmra.mxu0 %v540
  %v1654 = vpop.f32.mrf.mxu0
  %v1655 = vadd.f32 %v1566, %v1654
  %v1656 = vpop.f32.mrf.mxu0
  %v1657 = vadd.f32 %v1568, %v1656
  %1658 = vmatmul.bf16.gmra.mxu0 %v546
  %v1659 = vpop.f32.mrf.mxu0
  %v1660 = vadd.f32 %v1571, %v1659
  %v1661 = vpop.f32.mrf.mxu0
  %v1662 = vadd.f32 %v1573, %v1661
  %1663 = vmatmul.bf16.gmra.mxu0 %v552
  %v1664 = vpop.f32.mrf.mxu0
  %v1665 = vadd.f32 %v1576, %v1664
  %v1666 = vpop.f32.mrf.mxu0
  %v1667 = vadd.f32 %v1578, %v1666
  %1668 = vmatmul.bf16.gmra.mxu0 %v558
  %v1669 = vpop.f32.mrf.mxu0
  %v1670 = vadd.f32 %v1581, %v1669
  %v1671 = vpop.f32.mrf.mxu0
  %v1672 = vadd.f32 %v1583, %v1671
  %1673 = vmatmul.bf16.gmra.mxu0 %v564
  %v1674 = vpop.f32.mrf.mxu0
  %v1675 = vadd.f32 %v1586, %v1674
  %v1676 = vpop.f32.mrf.mxu0
  %v1677 = vadd.f32 %v1588, %v1676
  %1678 = vmatmul.bf16.gmra.mxu0 %v570
  %v1679 = vpop.f32.mrf.mxu0
  %v1680 = vadd.f32 %v1591, %v1679
  %v1681 = vpop.f32.mrf.mxu0
  %v1682 = vadd.f32 %v1593, %v1681
  %1683 = vmatmul.bf16.gmra.mxu0 %v576
  %v1684 = vpop.f32.mrf.mxu0
  %v1685 = vadd.f32 %v1596, %v1684
  %v1686 = vpop.f32.mrf.mxu0
  %v1687 = vadd.f32 %v1598, %v1686
  %1688 = vmatmul.bf16.gmra.mxu0 %v582
  %v1689 = vpop.f32.mrf.mxu0
  %v1690 = vadd.f32 %v1601, %v1689
  %v1691 = vpop.f32.mrf.mxu0
  %v1692 = vadd.f32 %v1603, %v1691
  %1693 = vmatmul.bf16.gmra.mxu0 %v588
  %v1694 = vpop.f32.mrf.mxu0
  %v1695 = vadd.f32 %v1606, %v1694
  %v1696 = vpop.f32.mrf.mxu0
  %v1697 = vadd.f32 %v1608, %v1696
  %1698 = vdwg.mxu0
  %1699 = vmatpush.bf16.msra.mxu0 %v988
  %1700 = vmatpush.bf16.msra.mxu0 %v986
  %1701 = vmatpush.bf16.msra.mxu0 %v984
  %1702 = vmatpush.bf16.msra.mxu0 %v982
  %1703 = vmatpush.bf16.msra.mxu0 %v980
  %1704 = vmatpush.bf16.msra.mxu0 %v978
  %1705 = vmatpush.bf16.msra.mxu0 %v976
  %1706 = vmatpush.bf16.msra.mxu0 %v974
  %1707 = vmatmul.bf16.gmra.mxu0 %v493
  %v1708 = vpop.f32.mrf.mxu0
  %v1709 = vadd.f32 0.0, %v1708
  %v1710 = vpop.f32.mrf.mxu0
  %v1711 = vadd.f32 0.0, %v1710
  %1712 = vmatmul.bf16.gmra.mxu0 %v499
  %v1713 = vpop.f32.mrf.mxu0
  %v1714 = vadd.f32 0.0, %v1713
  %v1715 = vpop.f32.mrf.mxu0
  %v1716 = vadd.f32 0.0, %v1715
  %1717 = vmatmul.bf16.gmra.mxu0 %v505
  %v1718 = vpop.f32.mrf.mxu0
  %v1719 = vadd.f32 0.0, %v1718
  %v1720 = vpop.f32.mrf.mxu0
  %v1721 = vadd.f32 0.0, %v1720
  %1722 = vmatmul.bf16.gmra.mxu0 %v511
  %v1723 = vpop.f32.mrf.mxu0
  %v1724 = vadd.f32 0.0, %v1723
  %v1725 = vpop.f32.mrf.mxu0
  %v1726 = vadd.f32 0.0, %v1725
  %1727 = vmatmul.bf16.gmra.mxu0 %v517
  %v1728 = vpop.f32.mrf.mxu0
  %v1729 = vadd.f32 0.0, %v1728
  %v1730 = vpop.f32.mrf.mxu0
  %v1731 = vadd.f32 0.0, %v1730
  %1732 = vmatmul.bf16.gmra.mxu0 %v523
  %v1733 = vpop.f32.mrf.mxu0
  %v1734 = vadd.f32 0.0, %v1733
  %v1735 = vpop.f32.mrf.mxu0
  %v1736 = vadd.f32 0.0, %v1735
  %1737 = vmatmul.bf16.gmra.mxu0 %v529
  %v1738 = vpop.f32.mrf.mxu0
  %v1739 = vadd.f32 0.0, %v1738
  %v1740 = vpop.f32.mrf.mxu0
  %v1741 = vadd.f32 0.0, %v1740
  %1742 = vmatmul.bf16.gmra.mxu0 %v535
  %v1743 = vpop.f32.mrf.mxu0
  %v1744 = vadd.f32 0.0, %v1743
  %v1745 = vpop.f32.mrf.mxu0
  %v1746 = vadd.f32 0.0, %v1745
  %1747 = vmatmul.bf16.gmra.mxu0 %v541
  %v1748 = vpop.f32.mrf.mxu0
  %v1749 = vadd.f32 0.0, %v1748
  %v1750 = vpop.f32.mrf.mxu0
  %v1751 = vadd.f32 0.0, %v1750
  %1752 = vmatmul.bf16.gmra.mxu0 %v547
  %v1753 = vpop.f32.mrf.mxu0
  %v1754 = vadd.f32 0.0, %v1753
  %v1755 = vpop.f32.mrf.mxu0
  %v1756 = vadd.f32 0.0, %v1755
  %1757 = vmatmul.bf16.gmra.mxu0 %v553
  %v1758 = vpop.f32.mrf.mxu0
  %v1759 = vadd.f32 0.0, %v1758
  %v1760 = vpop.f32.mrf.mxu0
  %v1761 = vadd.f32 0.0, %v1760
  %1762 = vmatmul.bf16.gmra.mxu0 %v559
  %v1763 = vpop.f32.mrf.mxu0
  %v1764 = vadd.f32 0.0, %v1763
  %v1765 = vpop.f32.mrf.mxu0
  %v1766 = vadd.f32 0.0, %v1765
  %1767 = vmatmul.bf16.gmra.mxu0 %v565
  %v1768 = vpop.f32.mrf.mxu0
  %v1769 = vadd.f32 0.0, %v1768
  %v1770 = vpop.f32.mrf.mxu0
  %v1771 = vadd.f32 0.0, %v1770
  %1772 = vmatmul.bf16.gmra.mxu0 %v571
  %v1773 = vpop.f32.mrf.mxu0
  %v1774 = vadd.f32 0.0, %v1773
  %v1775 = vpop.f32.mrf.mxu0
  %v1776 = vadd.f32 0.0, %v1775
  %1777 = vmatmul.bf16.gmra.mxu0 %v577
  %v1778 = vpop.f32.mrf.mxu0
  %v1779 = vadd.f32 0.0, %v1778
  %v1780 = vpop.f32.mrf.mxu0
  %v1781 = vadd.f32 0.0, %v1780
  %1782 = vmatmul.bf16.gmra.mxu0 %v583
  %v1783 = vpop.f32.mrf.mxu0
  %v1784 = vadd.f32 0.0, %v1783
  %v1785 = vpop.f32.mrf.mxu0
  %v1786 = vadd.f32 0.0, %v1785
  %1787 = vdwg.mxu0
  %1788 = vmatpush.bf16.msra.mxu0 %v1004
  %1789 = vmatpush.bf16.msra.mxu0 %v1002
  %1790 = vmatpush.bf16.msra.mxu0 %v1000
  %1791 = vmatpush.bf16.msra.mxu0 %v998
  %1792 = vmatpush.bf16.msra.mxu0 %v996
  %1793 = vmatpush.bf16.msra.mxu0 %v994
  %1794 = vmatpush.bf16.msra.mxu0 %v992
  %1795 = vmatpush.bf16.msra.mxu0 %v990
  %1796 = vmatmul.bf16.gmra.mxu0 %v494
  %v1797 = vpop.f32.mrf.mxu0
  %v1798 = vadd.f32 %v1709, %v1797
  %v1799 = vpop.f32.mrf.mxu0
  %v1800 = vadd.f32 %v1711, %v1799
  %1801 = vmatmul.bf16.gmra.mxu0 %v500
  %v1802 = vpop.f32.mrf.mxu0
  %v1803 = vadd.f32 %v1714, %v1802
  %v1804 = vpop.f32.mrf.mxu0
  %v1805 = vadd.f32 %v1716, %v1804
  %1806 = vmatmul.bf16.gmra.mxu0 %v506
  %v1807 = vpop.f32.mrf.mxu0
  %v1808 = vadd.f32 %v1719, %v1807
  %v1809 = vpop.f32.mrf.mxu0
  %v1810 = vadd.f32 %v1721, %v1809
  %1811 = vmatmul.bf16.gmra.mxu0 %v512
  %v1812 = vpop.f32.mrf.mxu0
  %v1813 = vadd.f32 %v1724, %v1812
  %v1814 = vpop.f32.mrf.mxu0
  %v1815 = vadd.f32 %v1726, %v1814
  %1816 = vmatmul.bf16.gmra.mxu0 %v518
  %v1817 = vpop.f32.mrf.mxu0
  %v1818 = vadd.f32 %v1729, %v1817
  %v1819 = vpop.f32.mrf.mxu0
  %v1820 = vadd.f32 %v1731, %v1819
  %1821 = vmatmul.bf16.gmra.mxu0 %v524
  %v1822 = vpop.f32.mrf.mxu0
  %v1823 = vadd.f32 %v1734, %v1822
  %v1824 = vpop.f32.mrf.mxu0
  %v1825 = vadd.f32 %v1736, %v1824
  %1826 = vmatmul.bf16.gmra.mxu0 %v530
  %v1827 = vpop.f32.mrf.mxu0
  %v1828 = vadd.f32 %v1739, %v1827
  %v1829 = vpop.f32.mrf.mxu0
  %v1830 = vadd.f32 %v1741, %v1829
  %1831 = vmatmul.bf16.gmra.mxu0 %v536
  %v1832 = vpop.f32.mrf.mxu0
  %v1833 = vadd.f32 %v1744, %v1832
  %v1834 = vpop.f32.mrf.mxu0
  %v1835 = vadd.f32 %v1746, %v1834
  %1836 = vmatmul.bf16.gmra.mxu0 %v542
  %v1837 = vpop.f32.mrf.mxu0
  %v1838 = vadd.f32 %v1749, %v1837
  %v1839 = vpop.f32.mrf.mxu0
  %v1840 = vadd.f32 %v1751, %v1839
  %1841 = vmatmul.bf16.gmra.mxu0 %v548
  %v1842 = vpop.f32.mrf.mxu0
  %v1843 = vadd.f32 %v1754, %v1842
  %v1844 = vpop.f32.mrf.mxu0
  %v1845 = vadd.f32 %v1756, %v1844
  %1846 = vmatmul.bf16.gmra.mxu0 %v554
  %v1847 = vpop.f32.mrf.mxu0
  %v1848 = vadd.f32 %v1759, %v1847
  %v1849 = vpop.f32.mrf.mxu0
  %v1850 = vadd.f32 %v1761, %v1849
  %1851 = vmatmul.bf16.gmra.mxu0 %v560
  %v1852 = vpop.f32.mrf.mxu0
  %v1853 = vadd.f32 %v1764, %v1852
  %v1854 = vpop.f32.mrf.mxu0
  %v1855 = vadd.f32 %v1766, %v1854
  %1856 = vmatmul.bf16.gmra.mxu0 %v566
  %v1857 = vpop.f32.mrf.mxu0
  %v1858 = vadd.f32 %v1769, %v1857
  %v1859 = vpop.f32.mrf.mxu0
  %v1860 = vadd.f32 %v1771, %v1859
  %1861 = vmatmul.bf16.gmra.mxu0 %v572
  %v1862 = vpop.f32.mrf.mxu0
  %v1863 = vadd.f32 %v1774, %v1862
  %v1864 = vpop.f32.mrf.mxu0
  %v1865 = vadd.f32 %v1776, %v1864
  %1866 = vmatmul.bf16.gmra.mxu0 %v578
  %v1867 = vpop.f32.mrf.mxu0
  %v1868 = vadd.f32 %v1779, %v1867
  %v1869 = vpop.f32.mrf.mxu0
  %v1870 = vadd.f32 %v1781, %v1869
  %1871 = vmatmul.bf16.gmra.mxu0 %v584
  %v1872 = vpop.f32.mrf.mxu0
  %v1873 = vadd.f32 %v1784, %v1872
  %v1874 = vpop.f32.mrf.mxu0
  %v1875 = vadd.f32 %v1786, %v1874
  %1876 = vdwg.mxu0
  %1877 = vmatpush.bf16.msra.mxu0 %v1020
  %1878 = vmatpush.bf16.msra.mxu0 %v1018
  %1879 = vmatpush.bf16.msra.mxu0 %v1016
  %1880 = vmatpush.bf16.msra.mxu0 %v1014
  %1881 = vmatpush.bf16.msra.mxu0 %v1012
  %1882 = vmatpush.bf16.msra.mxu0 %v1010
  %1883 = vmatpush.bf16.msra.mxu0 %v1008
  %1884 = vmatpush.bf16.msra.mxu0 %v1006
  %1885 = vmatmul.bf16.gmra.mxu0 %v495
  %v1886 = vpop.f32.mrf.mxu0
  %v1887 = vadd.f32 %v1798, %v1886
  %v1888 = vpop.f32.mrf.mxu0
  %v1889 = vadd.f32 %v1800, %v1888
  %1890 = vmatmul.bf16.gmra.mxu0 %v501
  %v1891 = vpop.f32.mrf.mxu0
  %v1892 = vadd.f32 %v1803, %v1891
  %v1893 = vpop.f32.mrf.mxu0
  %v1894 = vadd.f32 %v1805, %v1893
  %1895 = vmatmul.bf16.gmra.mxu0 %v507
  %v1896 = vpop.f32.mrf.mxu0
  %v1897 = vadd.f32 %v1808, %v1896
  %v1898 = vpop.f32.mrf.mxu0
  %v1899 = vadd.f32 %v1810, %v1898
  %1900 = vmatmul.bf16.gmra.mxu0 %v513
  %v1901 = vpop.f32.mrf.mxu0
  %v1902 = vadd.f32 %v1813, %v1901
  %v1903 = vpop.f32.mrf.mxu0
  %v1904 = vadd.f32 %v1815, %v1903
  %1905 = vmatmul.bf16.gmra.mxu0 %v519
  %v1906 = vpop.f32.mrf.mxu0
  %v1907 = vadd.f32 %v1818, %v1906
  %v1908 = vpop.f32.mrf.mxu0
  %v1909 = vadd.f32 %v1820, %v1908
  %1910 = vmatmul.bf16.gmra.mxu0 %v525
  %v1911 = vpop.f32.mrf.mxu0
  %v1912 = vadd.f32 %v1823, %v1911
  %v1913 = vpop.f32.mrf.mxu0
  %v1914 = vadd.f32 %v1825, %v1913
  %1915 = vmatmul.bf16.gmra.mxu0 %v531
  %v1916 = vpop.f32.mrf.mxu0
  %v1917 = vadd.f32 %v1828, %v1916
  %v1918 = vpop.f32.mrf.mxu0
  %v1919 = vadd.f32 %v1830, %v1918
  %1920 = vmatmul.bf16.gmra.mxu0 %v537
  %v1921 = vpop.f32.mrf.mxu0
  %v1922 = vadd.f32 %v1833, %v1921
  %v1923 = vpop.f32.mrf.mxu0
  %v1924 = vadd.f32 %v1835, %v1923
  %1925 = vmatmul.bf16.gmra.mxu0 %v543
  %v1926 = vpop.f32.mrf.mxu0
  %v1927 = vadd.f32 %v1838, %v1926
  %v1928 = vpop.f32.mrf.mxu0
  %v1929 = vadd.f32 %v1840, %v1928
  %1930 = vmatmul.bf16.gmra.mxu0 %v549
  %v1931 = vpop.f32.mrf.mxu0
  %v1932 = vadd.f32 %v1843, %v1931
  %v1933 = vpop.f32.mrf.mxu0
  %v1934 = vadd.f32 %v1845, %v1933
  %1935 = vmatmul.bf16.gmra.mxu0 %v555
  %v1936 = vpop.f32.mrf.mxu0
  %v1937 = vadd.f32 %v1848, %v1936
  %v1938 = vpop.f32.mrf.mxu0
  %v1939 = vadd.f32 %v1850, %v1938
  %1940 = vmatmul.bf16.gmra.mxu0 %v561
  %v1941 = vpop.f32.mrf.mxu0
  %v1942 = vadd.f32 %v1853, %v1941
  %v1943 = vpop.f32.mrf.mxu0
  %v1944 = vadd.f32 %v1855, %v1943
  %1945 = vmatmul.bf16.gmra.mxu0 %v567
  %v1946 = vpop.f32.mrf.mxu0
  %v1947 = vadd.f32 %v1858, %v1946
  %v1948 = vpop.f32.mrf.mxu0
  %v1949 = vadd.f32 %v1860, %v1948
  %1950 = vmatmul.bf16.gmra.mxu0 %v573
  %v1951 = vpop.f32.mrf.mxu0
  %v1952 = vadd.f32 %v1863, %v1951
  %v1953 = vpop.f32.mrf.mxu0
  %v1954 = vadd.f32 %v1865, %v1953
  %1955 = vmatmul.bf16.gmra.mxu0 %v579
  %v1956 = vpop.f32.mrf.mxu0
  %v1957 = vadd.f32 %v1868, %v1956
  %v1958 = vpop.f32.mrf.mxu0
  %v1959 = vadd.f32 %v1870, %v1958
  %1960 = vmatmul.bf16.gmra.mxu0 %v585
  %v1961 = vpop.f32.mrf.mxu0
  %v1962 = vadd.f32 %v1873, %v1961
  %v1963 = vpop.f32.mrf.mxu0
  %v1964 = vadd.f32 %v1875, %v1963
  %1965 = vdwg.mxu0
  %1966 = vmatpush.bf16.msra.mxu0 %v1036
  %1967 = vmatpush.bf16.msra.mxu0 %v1034
  %1968 = vmatpush.bf16.msra.mxu0 %v1032
  %1969 = vmatpush.bf16.msra.mxu0 %v1030
  %1970 = vmatpush.bf16.msra.mxu0 %v1028
  %1971 = vmatpush.bf16.msra.mxu0 %v1026
  %1972 = vmatpush.bf16.msra.mxu0 %v1024
  %1973 = vmatpush.bf16.msra.mxu0 %v1022
  %1974 = vmatmul.bf16.gmra.mxu0 %v496
  %v1975 = vpop.f32.mrf.mxu0
  %v1976 = vadd.f32 %v1887, %v1975
  %v1977 = vpop.f32.mrf.mxu0
  %v1978 = vadd.f32 %v1889, %v1977
  %1979 = vmatmul.bf16.gmra.mxu0 %v502
  %v1980 = vpop.f32.mrf.mxu0
  %v1981 = vadd.f32 %v1892, %v1980
  %v1982 = vpop.f32.mrf.mxu0
  %v1983 = vadd.f32 %v1894, %v1982
  %1984 = vmatmul.bf16.gmra.mxu0 %v508
  %v1985 = vpop.f32.mrf.mxu0
  %v1986 = vadd.f32 %v1897, %v1985
  %v1987 = vpop.f32.mrf.mxu0
  %v1988 = vadd.f32 %v1899, %v1987
  %1989 = vmatmul.bf16.gmra.mxu0 %v514
  %v1990 = vpop.f32.mrf.mxu0
  %v1991 = vadd.f32 %v1902, %v1990
  %v1992 = vpop.f32.mrf.mxu0
  %v1993 = vadd.f32 %v1904, %v1992
  %1994 = vmatmul.bf16.gmra.mxu0 %v520
  %v1995 = vpop.f32.mrf.mxu0
  %v1996 = vadd.f32 %v1907, %v1995
  %v1997 = vpop.f32.mrf.mxu0
  %v1998 = vadd.f32 %v1909, %v1997
  %1999 = vmatmul.bf16.gmra.mxu0 %v526
  %v2000 = vpop.f32.mrf.mxu0
  %v2001 = vadd.f32 %v1912, %v2000
  %v2002 = vpop.f32.mrf.mxu0
  %v2003 = vadd.f32 %v1914, %v2002
  %2004 = vmatmul.bf16.gmra.mxu0 %v532
  %v2005 = vpop.f32.mrf.mxu0
  %v2006 = vadd.f32 %v1917, %v2005
  %v2007 = vpop.f32.mrf.mxu0
  %v2008 = vadd.f32 %v1919, %v2007
  %2009 = vmatmul.bf16.gmra.mxu0 %v538
  %v2010 = vpop.f32.mrf.mxu0
  %v2011 = vadd.f32 %v1922, %v2010
  %v2012 = vpop.f32.mrf.mxu0
  %v2013 = vadd.f32 %v1924, %v2012
  %2014 = vmatmul.bf16.gmra.mxu0 %v544
  %v2015 = vpop.f32.mrf.mxu0
  %v2016 = vadd.f32 %v1927, %v2015
  %v2017 = vpop.f32.mrf.mxu0
  %v2018 = vadd.f32 %v1929, %v2017
  %2019 = vmatmul.bf16.gmra.mxu0 %v550
  %v2020 = vpop.f32.mrf.mxu0
  %v2021 = vadd.f32 %v1932, %v2020
  %v2022 = vpop.f32.mrf.mxu0
  %v2023 = vadd.f32 %v1934, %v2022
  %2024 = vmatmul.bf16.gmra.mxu0 %v556
  %v2025 = vpop.f32.mrf.mxu0
  %v2026 = vadd.f32 %v1937, %v2025
  %v2027 = vpop.f32.mrf.mxu0
  %v2028 = vadd.f32 %v1939, %v2027
  %2029 = vmatmul.bf16.gmra.mxu0 %v562
  %v2030 = vpop.f32.mrf.mxu0
  %v2031 = vadd.f32 %v1942, %v2030
  %v2032 = vpop.f32.mrf.mxu0
  %v2033 = vadd.f32 %v1944, %v2032
  %2034 = vmatmul.bf16.gmra.mxu0 %v568
  %v2035 = vpop.f32.mrf.mxu0
  %v2036 = vadd.f32 %v1947, %v2035
  %v2037 = vpop.f32.mrf.mxu0
  %v2038 = vadd.f32 %v1949, %v2037
  %2039 = vmatmul.bf16.gmra.mxu0 %v574
  %v2040 = vpop.f32.mrf.mxu0
  %v2041 = vadd.f32 %v1952, %v2040
  %v2042 = vpop.f32.mrf.mxu0
  %v2043 = vadd.f32 %v1954, %v2042
  %2044 = vmatmul.bf16.gmra.mxu0 %v580
  %v2045 = vpop.f32.mrf.mxu0
  %v2046 = vadd.f32 %v1957, %v2045
  %v2047 = vpop.f32.mrf.mxu0
  %v2048 = vadd.f32 %v1959, %v2047
  %2049 = vmatmul.bf16.gmra.mxu0 %v586
  %v2050 = vpop.f32.mrf.mxu0
  %v2051 = vadd.f32 %v1962, %v2050
  %v2052 = vpop.f32.mrf.mxu0
  %v2053 = vadd.f32 %v1964, %v2052
  %2054 = vdwg.mxu0
  %2055 = vmatpush.bf16.msra.mxu0 %v1052
  %2056 = vmatpush.bf16.msra.mxu0 %v1050
  %2057 = vmatpush.bf16.msra.mxu0 %v1048
  %2058 = vmatpush.bf16.msra.mxu0 %v1046
  %2059 = vmatpush.bf16.msra.mxu0 %v1044
  %2060 = vmatpush.bf16.msra.mxu0 %v1042
  %2061 = vmatpush.bf16.msra.mxu0 %v1040
  %2062 = vmatpush.bf16.msra.mxu0 %v1038
  %2063 = vmatmul.bf16.gmra.mxu0 %v497
  %v2064 = vpop.f32.mrf.mxu0
  %v2065 = vadd.f32 %v1976, %v2064
  %v2066 = vpop.f32.mrf.mxu0
  %v2067 = vadd.f32 %v1978, %v2066
  %2068 = vmatmul.bf16.gmra.mxu0 %v503
  %v2069 = vpop.f32.mrf.mxu0
  %v2070 = vadd.f32 %v1981, %v2069
  %v2071 = vpop.f32.mrf.mxu0
  %v2072 = vadd.f32 %v1983, %v2071
  %2073 = vmatmul.bf16.gmra.mxu0 %v509
  %v2074 = vpop.f32.mrf.mxu0
  %v2075 = vadd.f32 %v1986, %v2074
  %v2076 = vpop.f32.mrf.mxu0
  %v2077 = vadd.f32 %v1988, %v2076
  %2078 = vmatmul.bf16.gmra.mxu0 %v515
  %v2079 = vpop.f32.mrf.mxu0
  %v2080 = vadd.f32 %v1991, %v2079
  %v2081 = vpop.f32.mrf.mxu0
  %v2082 = vadd.f32 %v1993, %v2081
  %2083 = vmatmul.bf16.gmra.mxu0 %v521
  %v2084 = vpop.f32.mrf.mxu0
  %v2085 = vadd.f32 %v1996, %v2084
  %v2086 = vpop.f32.mrf.mxu0
  %v2087 = vadd.f32 %v1998, %v2086
  %2088 = vmatmul.bf16.gmra.mxu0 %v527
  %v2089 = vpop.f32.mrf.mxu0
  %v2090 = vadd.f32 %v2001, %v2089
  %v2091 = vpop.f32.mrf.mxu0
  %v2092 = vadd.f32 %v2003, %v2091
  %2093 = vmatmul.bf16.gmra.mxu0 %v533
  %v2094 = vpop.f32.mrf.mxu0
  %v2095 = vadd.f32 %v2006, %v2094
  %v2096 = vpop.f32.mrf.mxu0
  %v2097 = vadd.f32 %v2008, %v2096
  %2098 = vmatmul.bf16.gmra.mxu0 %v539
  %v2099 = vpop.f32.mrf.mxu0
  %v2100 = vadd.f32 %v2011, %v2099
  %v2101 = vpop.f32.mrf.mxu0
  %v2102 = vadd.f32 %v2013, %v2101
  %2103 = vmatmul.bf16.gmra.mxu0 %v545
  %v2104 = vpop.f32.mrf.mxu0
  %v2105 = vadd.f32 %v2016, %v2104
  %v2106 = vpop.f32.mrf.mxu0
  %v2107 = vadd.f32 %v2018, %v2106
  %2108 = vmatmul.bf16.gmra.mxu0 %v551
  %v2109 = vpop.f32.mrf.mxu0
  %v2110 = vadd.f32 %v2021, %v2109
  %v2111 = vpop.f32.mrf.mxu0
  %v2112 = vadd.f32 %v2023, %v2111
  %2113 = vmatmul.bf16.gmra.mxu0 %v557
  %v2114 = vpop.f32.mrf.mxu0
  %v2115 = vadd.f32 %v2026, %v2114
  %v2116 = vpop.f32.mrf.mxu0
  %v2117 = vadd.f32 %v2028, %v2116
  %2118 = vmatmul.bf16.gmra.mxu0 %v563
  %v2119 = vpop.f32.mrf.mxu0
  %v2120 = vadd.f32 %v2031, %v2119
  %v2121 = vpop.f32.mrf.mxu0
  %v2122 = vadd.f32 %v2033, %v2121
  %2123 = vmatmul.bf16.gmra.mxu0 %v569
  %v2124 = vpop.f32.mrf.mxu0
  %v2125 = vadd.f32 %v2036, %v2124
  %v2126 = vpop.f32.mrf.mxu0
  %v2127 = vadd.f32 %v2038, %v2126
  %2128 = vmatmul.bf16.gmra.mxu0 %v575
  %v2129 = vpop.f32.mrf.mxu0
  %v2130 = vadd.f32 %v2041, %v2129
  %v2131 = vpop.f32.mrf.mxu0
  %v2132 = vadd.f32 %v2043, %v2131
  %2133 = vmatmul.bf16.gmra.mxu0 %v581
  %v2134 = vpop.f32.mrf.mxu0
  %v2135 = vadd.f32 %v2046, %v2134
  %v2136 = vpop.f32.mrf.mxu0
  %v2137 = vadd.f32 %v2048, %v2136
  %2138 = vmatmul.bf16.gmra.mxu0 %v587
  %v2139 = vpop.f32.mrf.mxu0
  %v2140 = vadd.f32 %v2051, %v2139
  %v2141 = vpop.f32.mrf.mxu0
  %v2142 = vadd.f32 %v2053, %v2141
  %2143 = vdwg.mxu0
  %2144 = vmatpush.bf16.msra.mxu0 %v1068
  %2145 = vmatpush.bf16.msra.mxu0 %v1066
  %2146 = vmatpush.bf16.msra.mxu0 %v1064
  %2147 = vmatpush.bf16.msra.mxu0 %v1062
  %2148 = vmatpush.bf16.msra.mxu0 %v1060
  %2149 = vmatpush.bf16.msra.mxu0 %v1058
  %2150 = vmatpush.bf16.msra.mxu0 %v1056
  %2151 = vmatpush.bf16.msra.mxu0 %v1054
  %2152 = vmatmul.bf16.gmra.mxu0 %v498
  %v2153 = vpop.f32.mrf.mxu0
  %v2154 = vadd.f32 %v2065, %v2153
  %v2155 = vpop.f32.mrf.mxu0
  %v2156 = vadd.f32 %v2067, %v2155
  %2157 = vmatmul.bf16.gmra.mxu0 %v504
  %v2158 = vpop.f32.mrf.mxu0
  %v2159 = vadd.f32 %v2070, %v2158
  %v2160 = vpop.f32.mrf.mxu0
  %v2161 = vadd.f32 %v2072, %v2160
  %2162 = vmatmul.bf16.gmra.mxu0 %v510
  %v2163 = vpop.f32.mrf.mxu0
  %v2164 = vadd.f32 %v2075, %v2163
  %v2165 = vpop.f32.mrf.mxu0
  %v2166 = vadd.f32 %v2077, %v2165
  %2167 = vmatmul.bf16.gmra.mxu0 %v516
  %v2168 = vpop.f32.mrf.mxu0
  %v2169 = vadd.f32 %v2080, %v2168
  %v2170 = vpop.f32.mrf.mxu0
  %v2171 = vadd.f32 %v2082, %v2170
  %2172 = vmatmul.bf16.gmra.mxu0 %v522
  %v2173 = vpop.f32.mrf.mxu0
  %v2174 = vadd.f32 %v2085, %v2173
  %v2175 = vpop.f32.mrf.mxu0
  %v2176 = vadd.f32 %v2087, %v2175
  %2177 = vmatmul.bf16.gmra.mxu0 %v528
  %v2178 = vpop.f32.mrf.mxu0
  %v2179 = vadd.f32 %v2090, %v2178
  %v2180 = vpop.f32.mrf.mxu0
  %v2181 = vadd.f32 %v2092, %v2180
  %2182 = vmatmul.bf16.gmra.mxu0 %v534
  %v2183 = vpop.f32.mrf.mxu0
  %v2184 = vadd.f32 %v2095, %v2183
  %v2185 = vpop.f32.mrf.mxu0
  %v2186 = vadd.f32 %v2097, %v2185
  %2187 = vmatmul.bf16.gmra.mxu0 %v540
  %v2188 = vpop.f32.mrf.mxu0
  %v2189 = vadd.f32 %v2100, %v2188
  %v2190 = vpop.f32.mrf.mxu0
  %v2191 = vadd.f32 %v2102, %v2190
  %2192 = vmatmul.bf16.gmra.mxu0 %v546
  %v2193 = vpop.f32.mrf.mxu0
  %v2194 = vadd.f32 %v2105, %v2193
  %v2195 = vpop.f32.mrf.mxu0
  %v2196 = vadd.f32 %v2107, %v2195
  %2197 = vmatmul.bf16.gmra.mxu0 %v552
  %v2198 = vpop.f32.mrf.mxu0
  %v2199 = vadd.f32 %v2110, %v2198
  %v2200 = vpop.f32.mrf.mxu0
  %v2201 = vadd.f32 %v2112, %v2200
  %2202 = vmatmul.bf16.gmra.mxu0 %v558
  %v2203 = vpop.f32.mrf.mxu0
  %v2204 = vadd.f32 %v2115, %v2203
  %v2205 = vpop.f32.mrf.mxu0
  %v2206 = vadd.f32 %v2117, %v2205
  %2207 = vmatmul.bf16.gmra.mxu0 %v564
  %v2208 = vpop.f32.mrf.mxu0
  %v2209 = vadd.f32 %v2120, %v2208
  %v2210 = vpop.f32.mrf.mxu0
  %v2211 = vadd.f32 %v2122, %v2210
  %2212 = vmatmul.bf16.gmra.mxu0 %v570
  %v2213 = vpop.f32.mrf.mxu0
  %v2214 = vadd.f32 %v2125, %v2213
  %v2215 = vpop.f32.mrf.mxu0
  %v2216 = vadd.f32 %v2127, %v2215
  %2217 = vmatmul.bf16.gmra.mxu0 %v576
  %v2218 = vpop.f32.mrf.mxu0
  %v2219 = vadd.f32 %v2130, %v2218
  %v2220 = vpop.f32.mrf.mxu0
  %v2221 = vadd.f32 %v2132, %v2220
  %2222 = vmatmul.bf16.gmra.mxu0 %v582
  %v2223 = vpop.f32.mrf.mxu0
  %v2224 = vadd.f32 %v2135, %v2223
  %v2225 = vpop.f32.mrf.mxu0
  %v2226 = vadd.f32 %v2137, %v2225
  %2227 = vmatmul.bf16.gmra.mxu0 %v588
  %v2228 = vpop.f32.mrf.mxu0
  %v2229 = vadd.f32 %v2140, %v2228
  %v2230 = vpop.f32.mrf.mxu0
  %v2231 = vadd.f32 %v2142, %v2230
  %2232 = vdwg.mxu0
  %2233 = vst [vmem:[%s2] sm:$0xff] %v1620
  %vm2234 = vcmask 523264
  %2235 = vst.msk [vmem:[%s2 + $0x8] sm:$0xff] %vm2234, %v2154
  %2236 = vst [vmem:[%s2 + $0x10] sm:$0xff] %v1622
  %2237 = vst.msk [vmem:[%s2 + $0x18] sm:$0xff] %vm2234, %v2156
  %2238 = vst [vmem:[%s2 + $0x20] sm:$0xff] %v1625
  %2239 = vst.msk [vmem:[%s2 + $0x28] sm:$0xff] %vm2234, %v2159
  %2240 = vst [vmem:[%s2 + $0x30] sm:$0xff] %v1627
  %2241 = vst.msk [vmem:[%s2 + $0x38] sm:$0xff] %vm2234, %v2161
  %2242 = vst [vmem:[%s2 + $0x40] sm:$0xff] %v1630
  %2243 = vst.msk [vmem:[%s2 + $0x48] sm:$0xff] %vm2234, %v2164
  %2244 = vst [vmem:[%s2 + $0x50] sm:$0xff] %v1632
  %2245 = vst.msk [vmem:[%s2 + $0x58] sm:$0xff] %vm2234, %v2166
  %2246 = vst [vmem:[%s2 + $0x60] sm:$0xff] %v1635
  %2247 = vst.msk [vmem:[%s2 + $0x68] sm:$0xff] %vm2234, %v2169
  %2248 = vst [vmem:[%s2 + $0x70] sm:$0xff] %v1637
  %2249 = vst.msk [vmem:[%s2 + $0x78] sm:$0xff] %vm2234, %v2171
  %2250 = vst [vmem:[%s2 + $0x80] sm:$0xff] %v1640
  %2251 = vst.msk [vmem:[%s2 + $0x88] sm:$0xff] %vm2234, %v2174
  %2252 = vst [vmem:[%s2 + $0x90] sm:$0xff] %v1642
  %2253 = vst.msk [vmem:[%s2 + $0x98] sm:$0xff] %vm2234, %v2176
  %2254 = vst [vmem:[%s2 + $0xa0] sm:$0xff] %v1645
  %2255 = vst.msk [vmem:[%s2 + $0xa8] sm:$0xff] %vm2234, %v2179
  %2256 = vst [vmem:[%s2 + $0xb0] sm:$0xff] %v1647
  %2257 = vst.msk [vmem:[%s2 + $0xb8] sm:$0xff] %vm2234, %v2181
  %2258 = vst [vmem:[%s2 + $0xc0] sm:$0xff] %v1650
  %2259 = vst.msk [vmem:[%s2 + $0xc8] sm:$0xff] %vm2234, %v2184
  %2260 = vst [vmem:[%s2 + $0xd0] sm:$0xff] %v1652
  %2261 = vst.msk [vmem:[%s2 + $0xd8] sm:$0xff] %vm2234, %v2186
  %2262 = vst [vmem:[%s2 + $0xe0] sm:$0xff] %v1655
  %2263 = vst.msk [vmem:[%s2 + $0xe8] sm:$0xff] %vm2234, %v2189
  %2264 = vst [vmem:[%s2 + $0xf0] sm:$0xff] %v1657
  %2265 = vst.msk [vmem:[%s2 + $0xf8] sm:$0xff] %vm2234, %v2191
  %2266 = vst [vmem:[%s2 + $0x100] sm:$0xff] %v1660
  %2267 = vst.msk [vmem:[%s2 + $0x108] sm:$0xff] %vm2234, %v2194
  %2268 = vst [vmem:[%s2 + $0x110] sm:$0xff] %v1662
  %2269 = vst.msk [vmem:[%s2 + $0x118] sm:$0xff] %vm2234, %v2196
  %2270 = vst [vmem:[%s2 + $0x120] sm:$0xff] %v1665
  %2271 = vst.msk [vmem:[%s2 + $0x128] sm:$0xff] %vm2234, %v2199
  %2272 = vst [vmem:[%s2 + $0x130] sm:$0xff] %v1667
  %2273 = vst.msk [vmem:[%s2 + $0x138] sm:$0xff] %vm2234, %v2201
  %2274 = vst [vmem:[%s2 + $0x140] sm:$0xff] %v1670
  %2275 = vst.msk [vmem:[%s2 + $0x148] sm:$0xff] %vm2234, %v2204
  %2276 = vst [vmem:[%s2 + $0x150] sm:$0xff] %v1672
  %2277 = vst.msk [vmem:[%s2 + $0x158] sm:$0xff] %vm2234, %v2206
  %2278 = vst [vmem:[%s2 + $0x160] sm:$0xff] %v1675
  %2279 = vst.msk [vmem:[%s2 + $0x168] sm:$0xff] %vm2234, %v2209
  %2280 = vst [vmem:[%s2 + $0x170] sm:$0xff] %v1677
  %2281 = vst.msk [vmem:[%s2 + $0x178] sm:$0xff] %vm2234, %v2211
  %2282 = vst [vmem:[%s2 + $0x180] sm:$0xff] %v1680
  %2283 = vst.msk [vmem:[%s2 + $0x188] sm:$0xff] %vm2234, %v2214
  %2284 = vst [vmem:[%s2 + $0x190] sm:$0xff] %v1682
  %2285 = vst.msk [vmem:[%s2 + $0x198] sm:$0xff] %vm2234, %v2216
  %2286 = vst [vmem:[%s2 + $0x1a0] sm:$0xff] %v1685
  %2287 = vst.msk [vmem:[%s2 + $0x1a8] sm:$0xff] %vm2234, %v2219
  %2288 = vst [vmem:[%s2 + $0x1b0] sm:$0xff] %v1687
  %2289 = vst.msk [vmem:[%s2 + $0x1b8] sm:$0xff] %vm2234, %v2221
  %2290 = vst [vmem:[%s2 + $0x1c0] sm:$0xff] %v1690
  %2291 = vst.msk [vmem:[%s2 + $0x1c8] sm:$0xff] %vm2234, %v2224
  %2292 = vst [vmem:[%s2 + $0x1d0] sm:$0xff] %v1692
  %2293 = vst.msk [vmem:[%s2 + $0x1d8] sm:$0xff] %vm2234, %v2226
  %2294 = vst [vmem:[%s2 + $0x1e0] sm:$0xff] %v1695
  %2295 = vst.msk [vmem:[%s2 + $0x1e8] sm:$0xff] %vm2234, %v2229
  %2296 = vst [vmem:[%s2 + $0x1f0] sm:$0xff] %v1697
  %2297 = vst.msk [vmem:[%s2 + $0x1f8] sm:$0xff] %vm2234, %v2231
  %v2298 = vadd.f32 %v1620, %v1622
  %v2299 = vadd.f32 %v2298, %v1625
  %v2300 = vadd.f32 %v2299, %v1627
  %v2301 = vadd.f32 %v2300, %v1630
  %v2302 = vadd.f32 %v2301, %v1632
  %v2303 = vadd.f32 %v2302, %v1635
  %v2304 = vadd.f32 %v2303, %v1637
  %v2305 = vadd.f32 %v2304, %v1640
  %v2306 = vadd.f32 %v2305, %v1642
  %v2307 = vadd.f32 %v2306, %v1645
  %v2308 = vadd.f32 %v2307, %v1647
  %v2309 = vadd.f32 %v2308, %v1650
  %v2310 = vadd.f32 %v2309, %v1652
  %v2311 = vadd.f32 %v2310, %v1655
  %v2312 = vadd.f32 %v2311, %v1657
  %v2313 = vadd.f32 %v2312, %v1660
  %v2314 = vadd.f32 %v2313, %v1662
  %v2315 = vadd.f32 %v2314, %v1665
  %v2316 = vadd.f32 %v2315, %v1667
  %v2317 = vadd.f32 %v2316, %v1670
  %v2318 = vadd.f32 %v2317, %v1672
  %v2319 = vadd.f32 %v2318, %v1675
  %v2320 = vadd.f32 %v2319, %v1677
  %v2321 = vadd.f32 %v2320, %v1680
  %v2322 = vadd.f32 %v2321, %v1682
  %v2323 = vadd.f32 %v2322, %v1685
  %v2324 = vadd.f32 %v2323, %v1687
  %v2325 = vadd.f32 %v2324, %v1690
  %v2326 = vadd.f32 %v2325, %v1692
  %v2327 = vadd.f32 %v2326, %v1695
  %v2328 = vadd.f32 %v2327, %v1697
  %v2329 = vrot.slane %v2328, 4
  %v2330 = vadd.f32 %v2328, %v2329
  %v2331 = vrot.slane %v2330, 2
  %v2332 = vadd.f32 %v2330, %v2331
  %v2333 = vrot.slane %v2332, 1
  %v2334 = vadd.f32 %v2332, %v2333
  %v2335 = vsel %vm2234, %v2154, 0.0
  %v2336 = vsel %vm2234, %v2156, 0.0
  %v2337 = vadd.f32 %v2335, %v2336
  %v2338 = vsel %vm2234, %v2159, 0.0
  %v2339 = vadd.f32 %v2337, %v2338
  %v2340 = vsel %vm2234, %v2161, 0.0
  %v2341 = vadd.f32 %v2339, %v2340
  %v2342 = vsel %vm2234, %v2164, 0.0
  %v2343 = vadd.f32 %v2341, %v2342
  %v2344 = vsel %vm2234, %v2166, 0.0
  %v2345 = vadd.f32 %v2343, %v2344
  %v2346 = vsel %vm2234, %v2169, 0.0
  %v2347 = vadd.f32 %v2345, %v2346
  %v2348 = vsel %vm2234, %v2171, 0.0
  %v2349 = vadd.f32 %v2347, %v2348
  %v2350 = vsel %vm2234, %v2174, 0.0
  %v2351 = vadd.f32 %v2349, %v2350
  %v2352 = vsel %vm2234, %v2176, 0.0
  %v2353 = vadd.f32 %v2351, %v2352
  %v2354 = vsel %vm2234, %v2179, 0.0
  %v2355 = vadd.f32 %v2353, %v2354
  %v2356 = vsel %vm2234, %v2181, 0.0
  %v2357 = vadd.f32 %v2355, %v2356
  %v2358 = vsel %vm2234, %v2184, 0.0
  %v2359 = vadd.f32 %v2357, %v2358
  %v2360 = vsel %vm2234, %v2186, 0.0
  %v2361 = vadd.f32 %v2359, %v2360
  %v2362 = vsel %vm2234, %v2189, 0.0
  %v2363 = vadd.f32 %v2361, %v2362
  %v2364 = vsel %vm2234, %v2191, 0.0
  %v2365 = vadd.f32 %v2363, %v2364
  %v2366 = vsel %vm2234, %v2194, 0.0
  %v2367 = vadd.f32 %v2365, %v2366
  %v2368 = vsel %vm2234, %v2196, 0.0
  %v2369 = vadd.f32 %v2367, %v2368
  %v2370 = vsel %vm2234, %v2199, 0.0
  %v2371 = vadd.f32 %v2369, %v2370
  %v2372 = vsel %vm2234, %v2201, 0.0
  %v2373 = vadd.f32 %v2371, %v2372
  %v2374 = vsel %vm2234, %v2204, 0.0
  %v2375 = vadd.f32 %v2373, %v2374
  %v2376 = vsel %vm2234, %v2206, 0.0
  %v2377 = vadd.f32 %v2375, %v2376
  %v2378 = vsel %vm2234, %v2209, 0.0
  %v2379 = vadd.f32 %v2377, %v2378
  %v2380 = vsel %vm2234, %v2211, 0.0
  %v2381 = vadd.f32 %v2379, %v2380
  %v2382 = vsel %vm2234, %v2214, 0.0
  %v2383 = vadd.f32 %v2381, %v2382
  %v2384 = vsel %vm2234, %v2216, 0.0
  %v2385 = vadd.f32 %v2383, %v2384
  %v2386 = vsel %vm2234, %v2219, 0.0
  %v2387 = vadd.f32 %v2385, %v2386
  %v2388 = vsel %vm2234, %v2221, 0.0
  %v2389 = vadd.f32 %v2387, %v2388
  %v2390 = vsel %vm2234, %v2224, 0.0
  %v2391 = vadd.f32 %v2389, %v2390
  %v2392 = vsel %vm2234, %v2226, 0.0
  %v2393 = vadd.f32 %v2391, %v2392
  %v2394 = vsel %vm2234, %v2229, 0.0
  %v2395 = vadd.f32 %v2393, %v2394
  %v2396 = vsel %vm2234, %v2231, 0.0
  %v2397 = vadd.f32 %v2395, %v2396
  %v2398 = vrot.slane %v2397, 4
  %v2399 = vadd.f32 %v2397, %v2398
  %v2400 = vrot.slane %v2399, 2
  %v2401 = vadd.f32 %v2399, %v2400
  %v2402 = vrot.slane %v2401, 1
  %v2403 = vadd.f32 %v2401, %v2402
  %v2406 = vrot.slane %v2403, 7
  %vm2407 = vcmask 1040384
  %v2408 = vsel %vm2407, %v2334, %v2406
  %v2410 = vlaneseq
  %vm2411 = vcmp.ge.s32.totalorder %v2410, 0
  %vm2412 = vcmp.lt.s32.totalorder %v2410, 192
  %vm2413 = vmand %vm2411, %vm2412
  %2414 = vst.msk [vmem:[%s3] ss:$2 sm:$0x3] %vm2413, %v2408
  %v2415 = vmul.f32 %v1620, %v1620
  %v2416 = vmul.f32 %v2154, %v2154
  %v2417 = vmul.f32 %v1622, %v1622
  %v2418 = vmul.f32 %v2156, %v2156
  %v2419 = vmul.f32 %v1625, %v1625
  %v2420 = vmul.f32 %v2159, %v2159
  %v2421 = vmul.f32 %v1627, %v1627
  %v2422 = vmul.f32 %v2161, %v2161
  %v2423 = vmul.f32 %v1630, %v1630
  %v2424 = vmul.f32 %v2164, %v2164
  %v2425 = vmul.f32 %v1632, %v1632
  %v2426 = vmul.f32 %v2166, %v2166
  %v2427 = vmul.f32 %v1635, %v1635
  %v2428 = vmul.f32 %v2169, %v2169
  %v2429 = vmul.f32 %v1637, %v1637
  %v2430 = vmul.f32 %v2171, %v2171
  %v2431 = vmul.f32 %v1640, %v1640
  %v2432 = vmul.f32 %v2174, %v2174
  %v2433 = vmul.f32 %v1642, %v1642
  %v2434 = vmul.f32 %v2176, %v2176
  %v2435 = vmul.f32 %v1645, %v1645
  %v2436 = vmul.f32 %v2179, %v2179
  %v2437 = vmul.f32 %v1647, %v1647
  %v2438 = vmul.f32 %v2181, %v2181
  %v2439 = vmul.f32 %v1650, %v1650
  %v2440 = vmul.f32 %v2184, %v2184
  %v2441 = vmul.f32 %v1652, %v1652
  %v2442 = vmul.f32 %v2186, %v2186
  %v2443 = vmul.f32 %v1655, %v1655
  %v2444 = vmul.f32 %v2189, %v2189
  %v2445 = vmul.f32 %v1657, %v1657
  %v2446 = vmul.f32 %v2191, %v2191
  %v2447 = vmul.f32 %v1660, %v1660
  %v2448 = vmul.f32 %v2194, %v2194
  %v2449 = vmul.f32 %v1662, %v1662
  %v2450 = vmul.f32 %v2196, %v2196
  %v2451 = vmul.f32 %v1665, %v1665
  %v2452 = vmul.f32 %v2199, %v2199
  %v2453 = vmul.f32 %v1667, %v1667
  %v2454 = vmul.f32 %v2201, %v2201
  %v2455 = vmul.f32 %v1670, %v1670
  %v2456 = vmul.f32 %v2204, %v2204
  %v2457 = vmul.f32 %v1672, %v1672
  %v2458 = vmul.f32 %v2206, %v2206
  %v2459 = vmul.f32 %v1675, %v1675
  %v2460 = vmul.f32 %v2209, %v2209
  %v2461 = vmul.f32 %v1677, %v1677
  %v2462 = vmul.f32 %v2211, %v2211
  %v2463 = vmul.f32 %v1680, %v1680
  %v2464 = vmul.f32 %v2214, %v2214
  %v2465 = vmul.f32 %v1682, %v1682
  %v2466 = vmul.f32 %v2216, %v2216
  %v2467 = vmul.f32 %v1685, %v1685
  %v2468 = vmul.f32 %v2219, %v2219
  %v2469 = vmul.f32 %v1687, %v1687
  %v2470 = vmul.f32 %v2221, %v2221
  %v2471 = vmul.f32 %v1690, %v1690
  %v2472 = vmul.f32 %v2224, %v2224
  %v2473 = vmul.f32 %v1692, %v1692
  %v2474 = vmul.f32 %v2226, %v2226
  %v2475 = vmul.f32 %v1695, %v1695
  %v2476 = vmul.f32 %v2229, %v2229
  %v2477 = vmul.f32 %v1697, %v1697
  %v2478 = vmul.f32 %v2231, %v2231
  %v2479 = vadd.f32 %v2415, %v2417
  %v2480 = vadd.f32 %v2479, %v2419
  %v2481 = vadd.f32 %v2480, %v2421
  %v2482 = vadd.f32 %v2481, %v2423
  %v2483 = vadd.f32 %v2482, %v2425
  %v2484 = vadd.f32 %v2483, %v2427
  %v2485 = vadd.f32 %v2484, %v2429
  %v2486 = vadd.f32 %v2485, %v2431
  %v2487 = vadd.f32 %v2486, %v2433
  %v2488 = vadd.f32 %v2487, %v2435
  %v2489 = vadd.f32 %v2488, %v2437
  %v2490 = vadd.f32 %v2489, %v2439
  %v2491 = vadd.f32 %v2490, %v2441
  %v2492 = vadd.f32 %v2491, %v2443
  %v2493 = vadd.f32 %v2492, %v2445
  %v2494 = vadd.f32 %v2493, %v2447
  %v2495 = vadd.f32 %v2494, %v2449
  %v2496 = vadd.f32 %v2495, %v2451
  %v2497 = vadd.f32 %v2496, %v2453
  %v2498 = vadd.f32 %v2497, %v2455
  %v2499 = vadd.f32 %v2498, %v2457
  %v2500 = vadd.f32 %v2499, %v2459
  %v2501 = vadd.f32 %v2500, %v2461
  %v2502 = vadd.f32 %v2501, %v2463
  %v2503 = vadd.f32 %v2502, %v2465
  %v2504 = vadd.f32 %v2503, %v2467
  %v2505 = vadd.f32 %v2504, %v2469
  %v2506 = vadd.f32 %v2505, %v2471
  %v2507 = vadd.f32 %v2506, %v2473
  %v2508 = vadd.f32 %v2507, %v2475
  %v2509 = vadd.f32 %v2508, %v2477
  %v2510 = vrot.slane %v2509, 4
  %v2511 = vadd.f32 %v2509, %v2510
  %v2512 = vrot.slane %v2511, 2
  %v2513 = vadd.f32 %v2511, %v2512
  %v2514 = vrot.slane %v2513, 1
  %v2515 = vadd.f32 %v2513, %v2514
  %v2516 = vsel %vm2234, %v2416, 0.0
  %v2517 = vsel %vm2234, %v2418, 0.0
  %v2518 = vadd.f32 %v2516, %v2517
  %v2519 = vsel %vm2234, %v2420, 0.0
  %v2520 = vadd.f32 %v2518, %v2519
  %v2521 = vsel %vm2234, %v2422, 0.0
  %v2522 = vadd.f32 %v2520, %v2521
  %v2523 = vsel %vm2234, %v2424, 0.0
  %v2524 = vadd.f32 %v2522, %v2523
  %v2525 = vsel %vm2234, %v2426, 0.0
  %v2526 = vadd.f32 %v2524, %v2525
  %v2527 = vsel %vm2234, %v2428, 0.0
  %v2528 = vadd.f32 %v2526, %v2527
  %v2529 = vsel %vm2234, %v2430, 0.0
  %v2530 = vadd.f32 %v2528, %v2529
  %v2531 = vsel %vm2234, %v2432, 0.0
  %v2532 = vadd.f32 %v2530, %v2531
  %v2533 = vsel %vm2234, %v2434, 0.0
  %v2534 = vadd.f32 %v2532, %v2533
  %v2535 = vsel %vm2234, %v2436, 0.0
  %v2536 = vadd.f32 %v2534, %v2535
  %v2537 = vsel %vm2234, %v2438, 0.0
  %v2538 = vadd.f32 %v2536, %v2537
  %v2539 = vsel %vm2234, %v2440, 0.0
  %v2540 = vadd.f32 %v2538, %v2539
  %v2541 = vsel %vm2234, %v2442, 0.0
  %v2542 = vadd.f32 %v2540, %v2541
  %v2543 = vsel %vm2234, %v2444, 0.0
  %v2544 = vadd.f32 %v2542, %v2543
  %v2545 = vsel %vm2234, %v2446, 0.0
  %v2546 = vadd.f32 %v2544, %v2545
  %v2547 = vsel %vm2234, %v2448, 0.0
  %v2548 = vadd.f32 %v2546, %v2547
  %v2549 = vsel %vm2234, %v2450, 0.0
  %v2550 = vadd.f32 %v2548, %v2549
  %v2551 = vsel %vm2234, %v2452, 0.0
  %v2552 = vadd.f32 %v2550, %v2551
  %v2553 = vsel %vm2234, %v2454, 0.0
  %v2554 = vadd.f32 %v2552, %v2553
  %v2555 = vsel %vm2234, %v2456, 0.0
  %v2556 = vadd.f32 %v2554, %v2555
  %v2557 = vsel %vm2234, %v2458, 0.0
  %v2558 = vadd.f32 %v2556, %v2557
  %v2559 = vsel %vm2234, %v2460, 0.0
  %v2560 = vadd.f32 %v2558, %v2559
  %v2561 = vsel %vm2234, %v2462, 0.0
  %v2562 = vadd.f32 %v2560, %v2561
  %v2563 = vsel %vm2234, %v2464, 0.0
  %v2564 = vadd.f32 %v2562, %v2563
  %v2565 = vsel %vm2234, %v2466, 0.0
  %v2566 = vadd.f32 %v2564, %v2565
  %v2567 = vsel %vm2234, %v2468, 0.0
  %v2568 = vadd.f32 %v2566, %v2567
  %v2569 = vsel %vm2234, %v2470, 0.0
  %v2570 = vadd.f32 %v2568, %v2569
  %v2571 = vsel %vm2234, %v2472, 0.0
  %v2572 = vadd.f32 %v2570, %v2571
  %v2573 = vsel %vm2234, %v2474, 0.0
  %v2574 = vadd.f32 %v2572, %v2573
  %v2575 = vsel %vm2234, %v2476, 0.0
  %v2576 = vadd.f32 %v2574, %v2575
  %v2577 = vsel %vm2234, %v2478, 0.0
  %v2578 = vadd.f32 %v2576, %v2577
  %v2579 = vrot.slane %v2578, 4
  %v2580 = vadd.f32 %v2578, %v2579
  %v2581 = vrot.slane %v2580, 2
  %v2582 = vadd.f32 %v2580, %v2581
  %v2583 = vrot.slane %v2582, 1
  %v2584 = vadd.f32 %v2582, %v2583
  %v2587 = vrot.slane %v2584, 7
  %v2588 = vsel %vm2407, %v2515, %v2587
  %s2590 = scalar_lea.vmem %s3, 1
  %2591 = vst.msk [vmem:[%s2590] ss:$2 sm:$0x3] %vm2413, %v2588
  // Predicated region
  $region10: #{conv1x1_batchnorm.2} parent=0 // pred_check
    _
  $region11: #{conv1x1_batchnorm.2} parent=0 // pred_check_branch
    %2593 = sbr.rel (0) target = $region13
  $region12: #{conv1x1_batchnorm.2} parent=0 // pred_region
    _
  $region13: #{conv1x1_batchnorm.2} parent=0 // pred_fallthru
    _
  // Predicated region
  $region14: #{conv1x1_batchnorm.2} parent=0 // pred_check
    _
  $region15: #{conv1x1_batchnorm.2} parent=0 // pred_check_branch
    %2595 = sbr.rel (0) target = $region17
  $region16: #{conv1x1_batchnorm.2} parent=0 // pred_region
    _
  $region17: #{conv1x1_batchnorm.2} parent=0 // pred_fallthru
    _
  // Predicated region
  $region18: #{conv1x1_batchnorm.2} parent=0 // pred_check
    _
  $region19: #{conv1x1_batchnorm.2} parent=0 // pred_check_branch
    %2597 = sbr.rel (0) target = $region21
  $region20: #{conv1x1_batchnorm.2} parent=0 // pred_region
    _
  $region21: #{conv1x1_batchnorm.2} parent=0 // pred_fallthru
    _
  // Predicated region
  $region22: #{conv1x1_batchnorm.2} parent=0 // pred_check
    _
  $region23: #{conv1x1_batchnorm.2} parent=0 // pred_check_branch
    %2599 = sbr.rel (0) target = $region25
  $region24: #{conv1x1_batchnorm.2} parent=0 // pred_region
    _
  $region25: #{conv1x1_batchnorm.2} parent=0 // pred_fallthru
    _

</llo_original>
